<compile_context>
chip_gen: v6e
topology: v6e:2x2x1
jax: 0.10.0
libtpu: 0.0.40
codegen_flags: <defaults>
</compile_context>

<pallas_src>
import functools
import math

import jax
import jax.numpy as jnp
from jax.experimental import pallas as pl
from jax.experimental.pallas import tpu as pltpu

_MIB = 1024 * 1024


def _cdiv(a, b):
    return -(-a // b)


def _round_up(a, b):
    return _cdiv(a, b) * b


@functools.lru_cache(maxsize=None)
def _vmem_capacity_bytes():
    try:
        return int(pltpu.get_tpu_info().vmem_capacity_bytes)
    except Exception:
        return 64 * _MIB  # conservative default (v7x per-core VMEM)


@functools.lru_cache(maxsize=None)
def _budgets():
    cap = _vmem_capacity_bytes()
    vmem_limit = min(int(cap * 0.75), 100 * _MIB)          # 48 MiB v7x, 96 MiB v5e/v6e
    # f32 working bytes per two-pass tile; leaves room for 2x in + 2x out bufs + temporaries.
    tile_target = 6 * _MIB if cap <= 80 * _MIB else 8 * _MIB
    # x-resident fused slab cap (whole x kept in VMEM: 1 HBM read + 1 HBM write).
    fused_cap = max(4 * _MIB, int(vmem_limit * 0.75) - 20 * _MIB)
    return vmem_limit, tile_target, fused_cap


def _choose_packing(n, d):
    """Lane-dense packing factor k: k*d multiple of 128 when possible and k | n, so the
    (n, d) -> (n/k, k*d) reshape is a free relayout (no pad / no copy)."""
    if d % 128 == 0:
        return 1
    k = 128 // math.gcd(d, 128)  # power of two
    while k > 1 and n % k:
        k //= 2
    return k


def _pick_tile_rows(np_rows, dp, align, target_bytes, max_tile_rows=None):
    row_f32 = dp * 4
    t_max = max(align, (target_bytes // row_f32) // align * align)
    if max_tile_rows is not None:
        t_max = max(align, min(t_max, max(align, (max_tile_rows // align) * align)))
    num_tiles = _cdiv(max(np_rows, 1), t_max)
    return _round_up(_cdiv(max(np_rows, 1), num_tiles), align)


def _pick_chunk_rows(np_rows, dp, align, target_bytes=2 * _MIB):
    rows = max(align, (target_bytes // (dp * 4)) // align * align)
    return max(align, min(rows, _round_up(max(np_rows, 1), align)))


# ----------------------------------------------------------------------------
# Kernel 1 (two-pass): per-column shifted sum / sum-of-squares / one-hot violation,
# reduced over rows with an explicit 2-core split.  Sums go through the idle MXU.
# ----------------------------------------------------------------------------
def _stats_kernel(shift_ref, x_ref, sum_ref, sumsq_ref, viol_ref,
                  *, tile_rows, tiles_per_core, np_rows):
    c = pl.program_id(0)
    i = pl.program_id(1)

    @pl.when(i == 0)
    def _():
        sum_ref[...] = jnp.zeros_like(sum_ref)
        sumsq_ref[...] = jnp.zeros_like(sumsq_ref)
        viol_ref[...] = jnp.zeros_like(viol_ref)

    # mask rows beyond the end of the (un-padded) packed array; fully out-of-range
    # (clamped duplicate) tiles end up fully masked as well.
    row0 = (c * tiles_per_core + i) * tile_rows
    rows = jax.lax.broadcasted_iota(jnp.int32, (tile_rows, 1), 0)
    valid = rows < (np_rows - row0)
    x = jnp.where(valid, x_ref[...].astype(jnp.float32), 0.0)

    # cheap one-hot violation test: x*(x^2-1) != 0  <=>  x not in {0, 1, -1}
    viol = jnp.any(x * (x * x - 1.0) != 0.0, axis=0, keepdims=True)
    viol_ref[...] = jnp.maximum(viol_ref[...], viol.astype(jnp.float32))

    xc = x - shift_ref[...]
    ones8 = jnp.ones((8, tile_rows), jnp.float32)
    # MXU-offloaded axis-0 reductions (every output row holds the full column sum)
    sum_ref[...] += jnp.dot(ones8, xc, preferred_element_type=jnp.float32)
    sumsq_ref[...] += jnp.dot(ones8, xc * xc, preferred_element_type=jnp.float32)


def _batch_stats(xp, shift_t, tile_rows, vmem_limit):
    np_rows, dp = xp.shape
    n_tiles = _cdiv(np_rows, tile_rows)
    t2 = _cdiv(n_tiles, 2)
    kernel = functools.partial(_stats_kernel, tile_rows=tile_rows,
                               tiles_per_core=t2, np_rows=np_rows)

    def x_map(c, i):
        return (jnp.minimum(c * t2 + i, n_tiles - 1), 0)

    out_shape = tuple(jax.ShapeDtypeStruct((16, dp), jnp.float32) for _ in range(3))
    return pl.pallas_call(
        kernel,
        out_shape=out_shape,
        grid_spec=pltpu.PrefetchScalarGridSpec(
            num_scalar_prefetch=0,
            grid=(2, t2),
            in_specs=[
                pl.BlockSpec((1, dp), lambda c, i: (0, 0)),          # shift (tiled running mean)
                pl.BlockSpec((tile_rows, dp), x_map),                # x tile
            ],
            out_specs=tuple(pl.BlockSpec((8, dp), lambda c, i: (c, 0)) for _ in range(3)),
        ),
        compiler_params=pltpu.CompilerParams(
            dimension_semantics=("parallel", "arbitrary"),
            vmem_limit_bytes=vmem_limit,
        ),
    )(shift_t, xp)


# ----------------------------------------------------------------------------
# Kernel 2 (two-pass / eval): y = clip(x * scale - shift, -10, 10)
# ----------------------------------------------------------------------------
def _normalize_kernel(scale_ref, shift_ref, x_ref, o_ref):
    y = x_ref[...].astype(jnp.float32) * scale_ref[...] - shift_ref[...]
    o_ref[...] = jnp.clip(y, -10.0, 10.0).astype(o_ref.dtype)


def _normalize(xp, scale_t, shift_t, tile_rows, out_dtype, vmem_limit):
    np_rows, dp = xp.shape
    n_tiles = _cdiv(np_rows, tile_rows)
    return pl.pallas_call(
        _normalize_kernel,
        out_shape=jax.ShapeDtypeStruct((np_rows, dp), out_dtype),
        grid_spec=pltpu.PrefetchScalarGridSpec(
            num_scalar_prefetch=0,
            grid=(n_tiles,),
            in_specs=[
                pl.BlockSpec((1, dp), lambda i: (0, 0)),
                pl.BlockSpec((1, dp), lambda i: (0, 0)),
                pl.BlockSpec((tile_rows, dp), lambda i: (i, 0)),
            ],
            out_specs=pl.BlockSpec((tile_rows, dp), lambda i: (i, 0)),
        ),
        compiler_params=pltpu.CompilerParams(
            dimension_semantics=("parallel",),
            vmem_limit_bytes=vmem_limit,
        ),
    )(scale_t, shift_t, xp)


# ----------------------------------------------------------------------------
# Kernel 3 (fused, x-resident): grid (2, n_chunks).
#   phase 0: stream x chunks -> VMEM slab, accumulate shifted sums / one-hot violation
#   phase 1, chunk 0: fold k lane-groups, Welford merge, filter, precompute scale/shift
#   phase 1: normalize each slab chunk -> y (streams back to HBM via the pipeline)
# ----------------------------------------------------------------------------
def _fused_kernel(ns_ref, shift_ref, shiftf_ref, mean_ref, var_ref, filt_ref, x_ref,
                  y_ref, nmean_ref, nvar_ref, nfilt_ref,
                  slab, s_acc, ss_acc, viol_acc, scale_sc, off_sc,
                  *, chunk, n_chunks, np_rows, n_rows, k, d, exclude_one_hot):
    p = pl.program_id(0)
    c = pl.program_id(1)

    @pl.when((p == 0) & (c == 0))
    def _init():
        s_acc[...] = jnp.zeros_like(s_acc)
        ss_acc[...] = jnp.zeros_like(ss_acc)
        viol_acc[...] = jnp.zeros_like(viol_acc)

    @pl.when(p == 0)
    def _stats():
        row0 = pl.multiple_of(c * chunk, chunk)
        xin = x_ref[...]
        slab[pl.ds(row0, chunk), :] = xin                       # keep x resident in VMEM
        x = xin.astype(jnp.float32)
        rows = jax.lax.broadcasted_iota(jnp.int32, (chunk, 1), 0)
        x = jnp.where(rows < (np_rows - row0), x, 0.0)          # mask ragged tail rows
        viol = jnp.any(x * (x * x - 1.0) != 0.0, axis=0, keepdims=True)
        viol_acc[...] = jnp.maximum(viol_acc[...], viol.astype(jnp.float32))
        xc = x - shift_ref[...]
        ones8 = jnp.ones((8, chunk), jnp.float32)
        s_acc[...] += jnp.dot(ones8, xc, preferred_element_type=jnp.float32)
        ss_acc[...] += jnp.dot(ones8, xc * xc, preferred_element_type=jnp.float32)

    @pl.when((p == 1) & (c == 0))
    def _finalize():
        shift_t = shift_ref[...]                                 # (1, dp)
        # accumulator rows are identical -> a sublane max extracts the value
        s = jnp.max(s_acc[...], axis=0, keepdims=True)
        ss = jnp.max(ss_acc[...], axis=0, keepdims=True)
        viol_t = jnp.max(viol_acc[...], axis=0, keepdims=True)

        # remove masked (tail) rows' contribution: each added (-shift, +shift^2)
        invalid = jnp.float32(n_chunks * chunk - np_rows)
        s = s + invalid * shift_t
        ss = ss - invalid * shift_t * shift_t

        if k > 1:
            dp = k * d
            ri = jax.lax.broadcasted_iota(jnp.int32, (dp, d), 0) % d
            ci = jax.lax.broadcasted_iota(jnp.int32, (dp, d), 1)
            fold = (ri == ci).astype(jnp.float32)                # (dp, d): packed col -> feature
            s_f = jnp.dot(s, fold, preferred_element_type=jnp.float32)
            ss_f = jnp.dot(ss, fold, preferred_element_type=jnp.float32)
            viol_f = jnp.dot(viol_t, fold, preferred_element_type=jnp.float32) > 0.5
        else:
            s_f, ss_f = s, ss
            viol_f = viol_t > 0.5

        shift_f = shiftf_ref[...]                                # (1, d)
        nb = jnp.float32(n_rows)
        batch_mean = shift_f + s_f / nb
        batch_var = ss_f / nb - jnp.square(s_f / nb)

        mean_f = mean_ref[...]
        var_f = var_ref[...]
        filt_f = filt_ref[...]
        n_old = ns_ref[0].astype(jnp.float32)
        tot = n_old + nb
        delta = batch_mean - mean_f
        new_mean = mean_f + delta * (nb / tot)
        m2 = var_f * n_old + batch_var * nb + jnp.square(delta) * (n_old * nb / tot)
        new_var = jnp.clip(m2 / tot, 0.01, 1000.0)

        if exclude_one_hot:
            new_filt = filt_f * (1.0 - viol_f.astype(jnp.float32))
            keep = new_filt > 0.5
            stored_mean = jnp.where(keep, mean_f, new_mean)
            stored_var = jnp.where(keep, var_f, new_var)
        else:
            new_filt = filt_f
            stored_mean = new_mean
            stored_var = new_var

        nmean_ref[...] = stored_mean
        nvar_ref[...] = stored_var
        nfilt_ref[...] = new_filt

        scale_f = jax.lax.rsqrt(stored_var + 1e-8)
        off_f = stored_mean * scale_f
        if k > 1:
            dp = k * d
            rj = jax.lax.broadcasted_iota(jnp.int32, (d, dp), 0)
            cj = jax.lax.broadcasted_iota(jnp.int32, (d, dp), 1) % d
            tilem = (rj == cj).astype(jnp.float32)               # (d, dp): feature -> packed col
            scale_sc[...] = jnp.dot(scale_f, tilem, preferred_element_type=jnp.float32)
            off_sc[...] = jnp.dot(off_f, tilem, preferred_element_type=jnp.float32)
        else:
            scale_sc[...] = scale_f
            off_sc[...] = off_f

    @pl.when(p == 1)
    def _normalize_phase():
        row0 = pl.multiple_of(c * chunk, chunk)
        xs = slab[pl.ds(row0, chunk), :].astype(jnp.float32)     # reuse resident x (no 2nd read)
        y = xs * scale_sc[...] - off_sc[...]
        y_ref[...] = jnp.clip(y, -10.0, 10.0).astype(y_ref.dtype)


def _fused_call(ns, shift_t, shift_f, mean_f, var_f, filt_f, xp, *,
                chunk, n_chunks, np_rows, n_rows, k, d, exclude_one_hot,
                out_dtype, vmem_limit):
    dp = xp.shape[1]
    kernel = functools.partial(
        _fused_kernel, chunk=chunk, n_chunks=n_chunks, np_rows=np_rows,
        n_rows=n_rows, k=k, d=d, exclude_one_hot=exclude_one_hot)
    out_shape = (
        jax.ShapeDtypeStruct((np_rows, dp), out_dtype),   # y (packed view)
        jax.ShapeDtypeStruct((1, d), jnp.float32),        # stored mean
        jax.ShapeDtypeStruct((1, d), jnp.float32),        # stored var
        jax.ShapeDtypeStruct((1, d), jnp.float32),        # updated filter (0/1)
    )
    small = lambda p, c, ns: (0, 0)
    return pl.pallas_call(
        kernel,
        out_shape=out_shape,
        grid_spec=pltpu.PrefetchScalarGridSpec(
            num_scalar_prefetch=1,            # n_sample (int32) -> SMEM
            grid=(2, n_chunks),
            in_specs=[
                pl.BlockSpec((1, dp), small),   # shift, tiled
                pl.BlockSpec((1, d), small),    # shift, per-feature
                pl.BlockSpec((1, d), small),    # running mean
                pl.BlockSpec((1, d), small),    # running var
                pl.BlockSpec((1, d), small),    # one-hot filter (0/1)
                pl.BlockSpec((chunk, dp),
                             lambda p, c, ns: ((1 - p) * c + p * (n_chunks - 1), 0)),
            ],
            out_specs=(
                pl.BlockSpec((chunk, dp), lambda p, c, ns: (p * c, 0)),
                pl.BlockSpec((1, d), small),
                pl.BlockSpec((1, d), small),
                pl.BlockSpec((1, d), small),
            ),
            scratch_shapes=[
                pltpu.VMEM((n_chunks * chunk, dp), xp.dtype),   # x-resident slab
                pltpu.VMEM((8, dp), jnp.float32),               # sum acc
                pltpu.VMEM((8, dp), jnp.float32),               # sumsq acc
                pltpu.VMEM((8, dp), jnp.float32),               # violation acc
                pltpu.VMEM((1, dp), jnp.float32),               # scale (tiled)
                pltpu.VMEM((1, dp), jnp.float32),               # mean*scale (tiled)
            ],
        ),
        compiler_params=pltpu.CompilerParams(
            dimension_semantics=("arbitrary", "arbitrary"),
            vmem_limit_bytes=vmem_limit,
        ),
    )(ns, shift_t, shift_f, mean_f, var_f, filt_f, xp)


# ----------------------------------------------------------------------------
# Module-equivalent wrapper (functional state: mean, var, n_sample, one_hot_filter)
# ----------------------------------------------------------------------------
class DynamicNorm:
    def __init__(self, input_size, only_for_last_dim, exclude_one_hot=True, exclude_nan=False):
        assert only_for_last_dim
        assert not exclude_nan  # TODO(synk): exclude_nan row filtering not implemented
        self.input_size = input_size
        self.exclude_one_hot = exclude_one_hot
        self.exclude_nan = exclude_nan
        self.patience = 1000
        self.mean = jnp.zeros((input_size,), jnp.float32)
        self.var = jnp.ones((input_size,), jnp.float32)
        self.n_sample = jnp.zeros(
            (1,), jnp.int64 if jax.config.read("jax_enable_x64") else jnp.int32)
        if exclude_one_hot:
            self.one_hot_filter = jnp.ones((input_size,), jnp.bool_)
        self.training = True
        self._seen_data = False

    # -- helpers -------------------------------------------------------------
    def _tiled(self, v, k):
        return jnp.tile(v.reshape(1, -1).astype(jnp.float32), (1, k))

    def _shift_vec(self, x2d):
        # running mean as the variance shift; on the very first batch use the first data
        # row instead (avoids E[x^2]-E[x]^2 cancellation when |mean| >> std).
        if self._seen_data:
            return self.mean.astype(jnp.float32)
        return x2d[0].astype(jnp.float32)

    def _merge_stats(self, batch_mean, batch_var, viol, n):
        nb = jnp.float32(n)
        n_old = self.n_sample.astype(jnp.float32)[0]
        tot = n_old + nb
        delta = batch_mean - self.mean
        new_mean = self.mean + delta * (nb / tot)
        m2 = self.var * n_old + batch_var * nb + jnp.square(delta) * (n_old * nb / tot)
        new_var = jnp.clip(m2 / tot, 0.01, 1000.0)
        if self.exclude_one_hot:
            self.one_hot_filter = self.one_hot_filter & (~viol)
            self.mean = jnp.where(self.one_hot_filter, self.mean, new_mean)
            self.var = jnp.where(self.one_hot_filter, self.var, new_var)
        else:
            self.mean = new_mean
            self.var = new_var
        self.n_sample = self.n_sample + n

    def _fused_train(self, xp, shift_f, n, k, d, chunk, n_chunks, vmem_limit, out_dtype):
        shift_t = self._tiled(shift_f, k)
        mean_f = self.mean.reshape(1, d).astype(jnp.float32)
        var_f = self.var.reshape(1, d).astype(jnp.float32)
        filt = self.one_hot_filter if self.exclude_one_hot else jnp.ones((d,), jnp.bool_)
        filt_f = filt.astype(jnp.float32).reshape(1, d)
        ns = self.n_sample.astype(jnp.int32)
        yp, nm, nv, nf = _fused_call(
            ns, shift_t, shift_f.reshape(1, d), mean_f, var_f, filt_f, xp,
            chunk=chunk, n_chunks=n_chunks, np_rows=xp.shape[0], n_rows=n, k=k, d=d,
            exclude_one_hot=self.exclude_one_hot, out_dtype=out_dtype,
            vmem_limit=vmem_limit)
        self.mean = nm[0]
        self.var = nv[0]
        if self.exclude_one_hot:
            self.one_hot_filter = nf[0] > 0.5
        self.n_sample = self.n_sample + n
        return yp

    def _two_pass_train(self, xp, shift_f, n, k, d, align, tile_target, max_tile_rows,
                        vmem_limit, out_dtype, compute_output):
        np_rows, dp = xp.shape
        tile_rows = _pick_tile_rows(np_rows, dp, align, tile_target, max_tile_rows)
        shift_t = self._tiled(shift_f, k)
        s_p, ss_p, viol_p = _batch_stats(xp, shift_t, tile_rows, vmem_limit)

        n_tiles = _cdiv(np_rows, tile_rows)
        t2 = _cdiv(n_tiles, 2)
        invalid = float(2 * t2 * tile_rows - np_rows)   # masked rows (static)
        sh = shift_t[0]
        s_pk = s_p[0] + s_p[8] + invalid * sh
        ss_pk = ss_p[0] + ss_p[8] - invalid * sh * sh
        viol_pk = jnp.maximum(viol_p[0], viol_p[8])
        s = s_pk.reshape(k, d).sum(0)
        ss = ss_pk.reshape(k, d).sum(0)
        viol = viol_pk.reshape(k, d).max(0) > 0.5

        nb = jnp.float32(n)
        batch_mean = shift_f + s / nb
        batch_var = ss / nb - jnp.square(s / nb)
        self._merge_stats(batch_mean, batch_var, viol, n)

        if not compute_output:
            return None
        scale = jax.lax.rsqrt(self.var + 1e-8)
        off = self.mean * scale
        return _normalize(xp, self._tiled(scale, k), self._tiled(off, k),
                          tile_rows, out_dtype, vmem_limit)

    # -- forward -------------------------------------------------------------
    def forward(self, x, get_mu_var=False, *, force_two_pass=False, max_tile_rows=None):
        d = self.input_size
        assert x.shape[-1] == d, ("input_size", d, "x.shape[-1]", x.shape[-1])
        x2d = x.reshape(-1, d)
        n = int(x2d.shape[0])

        if n == 0:
            if get_mu_var:
                return self.mean, self.var
            y = jnp.clip((x - self.mean) / jnp.sqrt(self.var + 1e-8), -10.0, 10.0)
            return y.astype(x.dtype)

        vmem_limit, tile_target, fused_cap = _budgets()
        k = _choose_packing(n, d)
        dp = k * d
        np_rows = n // k
        xp = x2d.reshape(np_rows, dp)          # free, copy-less packed view
        itemsize = x.dtype.itemsize
        align = max(8, 32 // max(itemsize, 1))  # 8 f32 / 16 bf16 / 32 int8 sublane packing

        if self.training:
            shift_f = self._shift_vec(x2d)
            chunk = _pick_chunk_rows(np_rows, dp, align)
            n_chunks = _cdiv(np_rows, chunk)
            slab_bytes = n_chunks * chunk * dp * itemsize
            if (not force_two_pass) and slab_bytes <= fused_cap:
                yp = self._fused_train(xp, shift_f, n, k, d, chunk, n_chunks,
                                       vmem_limit, x.dtype)
            else:
                yp = self._two_pass_train(xp, shift_f, n, k, d, align, tile_target,
                                          max_tile_rows, vmem_limit, x.dtype,
                                          compute_output=not get_mu_var)
            self._seen_data = True
            if get_mu_var:
                return self.mean, self.var
            return yp.reshape(x.shape)

        if get_mu_var:
            return self.mean, self.var
        tile_rows = _pick_tile_rows(np_rows, dp, align, tile_target, max_tile_rows)
        scale = jax.lax.rsqrt(self.var + 1e-8)
        off = self.mean * scale
        yp = _normalize(xp, self._tiled(scale, k), self._tiled(off, k),
                        tile_rows, x.dtype, vmem_limit)
        return yp.reshape(x.shape)


# ----------------------------------------------------------------------------
# Pure-JAX reference (one training step) for sanity checking
# ----------------------------------------------------------------------------
def _reference_step(x, state):
    mean, var, n_sample, filt = state
    d = x.shape[-1]
    x2d = x.reshape(-1, d)
    n = x2d.shape[0]
    bm = jnp.mean(x2d, axis=0)
    bv = jnp.var(x2d, axis=0)
    n_old = n_sample.astype(jnp.float32)[0]
    tot = n_old + n
    delta = bm - mean
    new_mean = mean + delta * n / tot
    m2 = var * n_old + bv * n + jnp.square(delta) * n_old * n / tot
    new_var = jnp.clip(m2 / tot, 0.01, 1000.0)
    new_filt = filt & ~jnp.any((x2d != 0) & (x2d != 1) & (x2d != -1), axis=0)
    mean_u = jnp.where(new_filt, mean, new_mean)
    var_u = jnp.where(new_filt, var, new_var)
    y = jnp.clip((x - mean_u) / jnp.sqrt(var_u + 1e-8), -10.0, 10.0)
    return y, (mean_u, var_u, n_sample + n, new_filt)


if __name__ == "__main__":
    key = jax.random.PRNGKey(0)
    k1, k2, k3, k4 = jax.random.split(key, 4)

    # --- Test 1: small input -> fused x-resident kernel, two consecutive training steps -----
    B, T, D = 4, 8, 32
    xa = jax.random.normal(k1, (B, T, D), jnp.float32) * 3.0 + 1.5
    onehot_cols = (jax.random.uniform(k2, (B, T, 8)) > 0.5).astype(jnp.float32)
    xa = xa.at[..., :8].set(onehot_cols)
    xb = jax.random.normal(k3, (B, T, D), jnp.float32) * 0.5 - 2.0

    dn = DynamicNorm(D, only_for_last_dim=True, exclude_one_hot=True)
    state = (dn.mean, dn.var, dn.n_sample, dn.one_hot_filter)
    ya = dn.forward(xa)
    yb = dn.forward(xb)
    jax.block_until_ready(yb)
    ya_ref, state = _reference_step(xa, state)
    yb_ref, state = _reference_step(xb, state)
    assert jnp.allclose(ya, ya_ref, atol=2e-3, rtol=2e-3), "fused: step-1 output mismatch"
    assert jnp.allclose(yb, yb_ref, atol=2e-3, rtol=2e-3), "fused: step-2 output mismatch"
    assert jnp.allclose(dn.mean, state[0], atol=2e-3, rtol=2e-3), "fused: mean mismatch"
    assert jnp.allclose(dn.var, state[1], atol=2e-3, rtol=2e-3), "fused: var mismatch"
    assert bool(jnp.all(dn.one_hot_filter == state[3])), "fused: filter mismatch"
    assert int(dn.n_sample[0]) == 2 * B * T

    # --- Test 2: larger, non-tile-aligned row count -> two-pass (2-core stats + normalize) --
    N2, D2 = 4100, 32
    xc_ = jax.random.normal(k4, (N2, D2), jnp.float32) * 2.0 - 0.7
    xd_ = jax.random.normal(jax.random.PRNGKey(7), (N2, D2), jnp.float32) * 0.5 + 3.0
    xc_ = xc_.at[:, :4].set((xc_[:, :4] > 0).astype(jnp.float32))
    xd_ = xd_.at[:, :4].set((xd_[:, :4] > 0).astype(jnp.float32))

    dn2 = DynamicNorm(D2, only_for_last_dim=True, exclude_one_hot=True)
    st2 = (dn2.mean, dn2.var, dn2.n_sample, dn2.one_hot_filter)
    yc = dn2.forward(xc_, force_two_pass=True, max_tile_rows=64)
    yd = dn2.forward(xd_, force_two_pass=True, max_tile_rows=64)
    jax.block_until_ready(yd)
    yc_ref, st2 = _reference_step(xc_, st2)
    yd_ref, st2 = _reference_step(xd_, st2)
    assert jnp.allclose(yc, yc_ref, atol=2e-3, rtol=2e-3), "two-pass: step-1 output mismatch"
    assert jnp.allclose(yd, yd_ref, atol=2e-3, rtol=2e-3), "two-pass: step-2 output mismatch"
    assert jnp.allclose(dn2.mean, st2[0], atol=2e-3, rtol=2e-3), "two-pass: mean mismatch"
    assert jnp.allclose(dn2.var, st2[1], atol=2e-3, rtol=2e-3), "two-pass: var mismatch"
    assert bool(jnp.all(dn2.one_hot_filter == st2[3])), "two-pass: filter mismatch"
    assert int(dn2.n_sample[0]) == 2 * N2

    # --- Test 3: eval mode -> normalize-only kernel ------------------------------------------
    dn2.training = False
    ye = dn2.forward(xc_)
    jax.block_until_ready(ye)
    ye_ref = jnp.clip((xc_ - st2[0]) / jnp.sqrt(st2[1] + 1e-8), -10.0, 10.0)
    assert jnp.allclose(ye, ye_ref, atol=2e-3, rtol=2e-3), "eval: output mismatch"

    # --- Test 4: row count not divisible by the packing factor -> k=1 fallback (no pad copy) -
    N4, D4 = 37, 32
    xf = jax.random.normal(jax.random.PRNGKey(11), (N4, D4), jnp.float32) * 1.7 + 0.3
    dn3 = DynamicNorm(D4, only_for_last_dim=True, exclude_one_hot=True)
    st3 = (dn3.mean, dn3.var, dn3.n_sample, dn3.one_hot_filter)
    yf = dn3.forward(xf)
    jax.block_until_ready(yf)
    yf_ref, st3 = _reference_step(xf, st3)
    assert jnp.allclose(yf, yf_ref, atol=2e-3, rtol=2e-3), "k=1 fused: output mismatch"
    assert jnp.allclose(dn3.mean, st3[0], atol=2e-3, rtol=2e-3), "k=1 fused: mean mismatch"
    assert jnp.allclose(dn3.var, st3[1], atol=2e-3, rtol=2e-3), "k=1 fused: var mismatch"

    print("KERNEL_OK")
</pallas_src>

<mosaic_0001>
module attributes {stable_mosaic.version = 11 : i64} {
  func.func @_fused_kernel(%arg0: i32, %arg1: i32, %arg2: memref<1xi32, #tpu.memory_space<smem>>, %arg3: memref<1x128xf32, #tpu.memory_space<vmem>>, %arg4: memref<1x32xf32, #tpu.memory_space<vmem>>, %arg5: memref<1x32xf32, #tpu.memory_space<vmem>>, %arg6: memref<1x32xf32, #tpu.memory_space<vmem>>, %arg7: memref<1x32xf32, #tpu.memory_space<vmem>>, %arg8: memref<8x128xf32, #tpu.memory_space<vmem>>, %arg9: memref<8x128xf32, #tpu.memory_space<vmem>>, %arg10: memref<1x32xf32, #tpu.memory_space<vmem>>, %arg11: memref<1x32xf32, #tpu.memory_space<vmem>>, %arg12: memref<1x32xf32, #tpu.memory_space<vmem>>, %arg13: memref<8x128xf32, #tpu.memory_space<vmem>>, %arg14: memref<8x128xf32, #tpu.memory_space<vmem>>, %arg15: memref<8x128xf32, #tpu.memory_space<vmem>>, %arg16: memref<8x128xf32, #tpu.memory_space<vmem>>, %arg17: memref<1x128xf32, #tpu.memory_space<vmem>>, %arg18: memref<1x128xf32, #tpu.memory_space<vmem>>) attributes {dimension_semantics = [#tpu.dimension_semantics<arbitrary>, #tpu.dimension_semantics<arbitrary>], iteration_bounds = array<i64: 2, 1>, scalar_prefetch = 1 : i64, scratch_operands = 6 : i64, tpu.core_type = #tpu.core_type<tc>, window_params = [{pipeline_mode = #tpu.pipeline_mode<synchronous>, transform_indices = @transform_0, window_bounds = array<i64: 1, 128>}, {pipeline_mode = #tpu.pipeline_mode<synchronous>, transform_indices = @transform_1, window_bounds = array<i64: 1, 32>}, {pipeline_mode = #tpu.pipeline_mode<synchronous>, transform_indices = @transform_2, window_bounds = array<i64: 1, 32>}, {pipeline_mode = #tpu.pipeline_mode<synchronous>, transform_indices = @transform_3, window_bounds = array<i64: 1, 32>}, {pipeline_mode = #tpu.pipeline_mode<synchronous>, transform_indices = @transform_4, window_bounds = array<i64: 1, 32>}, {transform_indices = @transform_5, window_bounds = array<i64: 8, 128>}, {transform_indices = @transform_6, window_bounds = array<i64: 8, 128>}, {pipeline_mode = #tpu.pipeline_mode<synchronous>, transform_indices = @transform_7, window_bounds = array<i64: 1, 32>}, {pipeline_mode = #tpu.pipeline_mode<synchronous>, transform_indices = @transform_8, window_bounds = array<i64: 1, 32>}, {pipeline_mode = #tpu.pipeline_mode<synchronous>, transform_indices = @transform_9, window_bounds = array<i64: 1, 32>}]} {
    %c0_i32 = arith.constant 0 : i32
    %0 = arith.cmpi eq, %arg0, %c0_i32 : i32
    %c0_i32_0 = arith.constant 0 : i32
    %1 = arith.cmpi eq, %arg1, %c0_i32_0 : i32
    %2 = arith.andi %0, %1 : i1
    %3 = arith.extui %2 : i1 to i32
    %c0_i32_1 = arith.constant 0 : i32
    %4 = arith.cmpi ne, %3, %c0_i32_1 : i32
    scf.if %4 {
      %cst = arith.constant 0.000000e+00 : f32
      %16 = vector.broadcast %cst : f32 to vector<8x128xf32>
      %c0 = arith.constant 0 : index
      %c0_8 = arith.constant 0 : index
      %17 = vector.load %arg14[%c0, %c0_8] : memref<8x128xf32, #tpu.memory_space<vmem>>, vector<8x128xf32>
      tpu.vector_store %arg14[%c0, %c0_8], %16 {strides = array<i32>} : memref<8x128xf32, #tpu.memory_space<vmem>>, vector<8x128xf32>,
      %cst_9 = arith.constant 0.000000e+00 : f32
      %18 = vector.broadcast %cst_9 : f32 to vector<8x128xf32>
      %c0_10 = arith.constant 0 : index
      %c0_11 = arith.constant 0 : index
      %19 = vector.load %arg15[%c0_10, %c0_11] : memref<8x128xf32, #tpu.memory_space<vmem>>, vector<8x128xf32>
      tpu.vector_store %arg15[%c0_10, %c0_11], %18 {strides = array<i32>} : memref<8x128xf32, #tpu.memory_space<vmem>>, vector<8x128xf32>,
      %cst_12 = arith.constant 0.000000e+00 : f32
      %20 = vector.broadcast %cst_12 : f32 to vector<8x128xf32>
      %c0_13 = arith.constant 0 : index
      %c0_14 = arith.constant 0 : index
      %21 = vector.load %arg16[%c0_13, %c0_14] : memref<8x128xf32, #tpu.memory_space<vmem>>, vector<8x128xf32>
      tpu.vector_store %arg16[%c0_13, %c0_14], %20 {strides = array<i32>} : memref<8x128xf32, #tpu.memory_space<vmem>>, vector<8x128xf32>,
    } else {
    }
    %c0_i32_2 = arith.constant 0 : i32
    %5 = arith.cmpi eq, %arg0, %c0_i32_2 : i32
    %6 = arith.extui %5 : i1 to i32
    %c0_i32_3 = arith.constant 0 : i32
    %7 = arith.cmpi ne, %6, %c0_i32_3 : i32
    scf.if %7 {
      %c8_i32 = arith.constant 8 : i32
      %16 = arith.muli %arg1, %c8_i32 : i32
      %17 = tpu.assume_multiple %16, 8 : i32
      %c0 = arith.constant 0 : index
      %c0_8 = arith.constant 0 : index
      %18 = vector.load %arg8[%c0, %c0_8] : memref<8x128xf32, #tpu.memory_space<vmem>>, vector<8x128xf32>
      %19 = arith.index_cast %17 : i32 to index
      %c0_9 = arith.constant 0 : index
      %20 = vector.load %arg13[%19, %c0_9] : memref<8x128xf32, #tpu.memory_space<vmem>>, vector<8x128xf32>
      tpu.vector_store %arg13[%19, %c0_9], %18 {strides = array<i32>} : memref<8x128xf32, #tpu.memory_space<vmem>>, vector<8x128xf32>,
      %21 = tpu.iota {dimensions = array<i32: 0>} : vector<8x1xi32>
      %c8_i32_10 = arith.constant 8 : i32
      %22 = arith.subi %c8_i32_10, %17 : i32
      %23 = vector.broadcast %22 : i32 to vector<8x1xi32>
      %24 = arith.cmpi slt, %21, %23 : vector<8x1xi32>
      %cst = arith.constant 0.000000e+00 : f32
      %25 = vector.shape_cast %24 : vector<8x1xi1> to vector<8x1xi1>
      %26 = vector.broadcast %25 : vector<8x1xi1> to vector<8x128xi1>
      %27 = vector.broadcast %cst : f32 to vector<8x128xf32>
      %28 = arith.select %26, %18, %27 : vector<8x128xi1>, vector<8x128xf32>
      %29 = arith.mulf %28, %28 : vector<8x128xf32>
      %cst_11 = arith.constant 1.000000e+00 : f32
      %30 = vector.broadcast %cst_11 : f32 to vector<8x128xf32>
      %31 = arith.subf %29, %30 : vector<8x128xf32>
      %32 = arith.mulf %28, %31 : vector<8x128xf32>
      %cst_12 = arith.constant 0.000000e+00 : f32
      %33 = vector.broadcast %cst_12 : f32 to vector<8x128xf32>
      %34 = arith.cmpf one, %32, %33 : vector<8x128xf32>
      %cst_13 = arith.constant 1.000000e+00 : f32
      %cst_14 = arith.constant 0.000000e+00 : f32
      %35 = vector.broadcast %cst_13 : f32 to vector<8x128xf32>
      %36 = vector.broadcast %cst_14 : f32 to vector<8x128xf32>
      %37 = arith.select %34, %35, %36 : vector<8x128xi1>, vector<8x128xf32>
      %cst_15 = arith.constant dense<0xFF800000> : vector<128xf32>
      %38 = vector.multi_reduction <maximumf>, %37, %cst_15 [0] : vector<8x128xf32> to vector<128xf32>
      %cst_16 = arith.constant 0.000000e+00 : f32
      %39 = vector.broadcast %cst_16 : f32 to vector<128xf32>
      %40 = arith.cmpf ogt, %38, %39 : vector<128xf32>
      %41 = vector.shape_cast %40 : vector<128xi1> to vector<1x128xi1>
      %c0_17 = arith.constant 0 : index
      %c0_18 = arith.constant 0 : index
      %42 = vector.load %arg16[%c0_17, %c0_18] : memref<8x128xf32, #tpu.memory_space<vmem>>, vector<8x128xf32>
      %43 = arith.extui %41 : vector<1x128xi1> to vector<1x128xi32>
      %44 = arith.sitofp %43 : vector<1x128xi32> to vector<1x128xf32>
      %45 = vector.broadcast %44 : vector<1x128xf32> to vector<8x128xf32>
      %46 = arith.maximumf %42, %45 : vector<8x128xf32>
      %c0_19 = arith.constant 0 : index
      %c0_20 = arith.constant 0 : index
      %47 = vector.load %arg16[%c0_19, %c0_20] : memref<8x128xf32, #tpu.memory_space<vmem>>, vector<8x128xf32>
      tpu.vector_store %arg16[%c0_19, %c0_20], %46 {strides = array<i32>} : memref<8x128xf32, #tpu.memory_space<vmem>>, vector<8x128xf32>,
      %c0_21 = arith.constant 0 : index
      %c0_22 = arith.constant 0 : index
      %48 = vector.load %arg3[%c0_21, %c0_22] : memref<1x128xf32, #tpu.memory_space<vmem>>, vector<1x128xf32>
      %49 = vector.broadcast %48 : vector<1x128xf32> to vector<8x128xf32>
      %50 = arith.subf %28, %49 : vector<8x128xf32>
      %cst_23 = arith.constant 1.000000e+00 : f32
      %51 = vector.broadcast %cst_23 : f32 to vector<8x8xf32>
      %c0_24 = arith.constant 0 : index
      %c0_25 = arith.constant 0 : index
      %52 = vector.load %arg14[%c0_24, %c0_25] : memref<8x128xf32, #tpu.memory_space<vmem>>, vector<8x128xf32>
      %cst_26 = arith.constant dense<0.000000e+00> : vector<8x128xf32>
      %53 = tpu.matmul %51, %50, %cst_26 {dimension_numbers = #tpu.dot_dimension_numbers<[1], [0], [0], [1], [0, 0, 1, 1], [], []>} : vector<8x8xf32>, vector<8x128xf32>, vector<8x128xf32> -> vector<8x128xf32>
      %54 = arith.addf %52, %53 : vector<8x128xf32>
      %c0_27 = arith.constant 0 : index
      %c0_28 = arith.constant 0 : index
      %55 = vector.load %arg14[%c0_27, %c0_28] : memref<8x128xf32, #tpu.memory_space<vmem>>, vector<8x128xf32>
      tpu.vector_store %arg14[%c0_27, %c0_28], %54 {strides = array<i32>} : memref<8x128xf32, #tpu.memory_space<vmem>>, vector<8x128xf32>,
      %c0_29 = arith.constant 0 : index
      %c0_30 = arith.constant 0 : index
      %56 = vector.load %arg15[%c0_29, %c0_30] : memref<8x128xf32, #tpu.memory_space<vmem>>, vector<8x128xf32>
      %57 = arith.mulf %50, %50 : vector<8x128xf32>
      %cst_31 = arith.constant dense<0.000000e+00> : vector<8x128xf32>
      %58 = tpu.matmul %51, %57, %cst_31 {dimension_numbers = #tpu.dot_dimension_numbers<[1], [0], [0], [1], [0, 0, 1, 1], [], []>} : vector<8x8xf32>, vector<8x128xf32>, vector<8x128xf32> -> vector<8x128xf32>
      %59 = arith.addf %56, %58 : vector<8x128xf32>
      %c0_32 = arith.constant 0 : index
      %c0_33 = arith.constant 0 : index
      %60 = vector.load %arg15[%c0_32, %c0_33] : memref<8x128xf32, #tpu.memory_space<vmem>>, vector<8x128xf32>
      tpu.vector_store %arg15[%c0_32, %c0_33], %59 {strides = array<i32>} : memref<8x128xf32, #tpu.memory_space<vmem>>, vector<8x128xf32>,
    } else {
    }
    %c1_i32 = arith.constant 1 : i32
    %8 = arith.cmpi eq, %arg0, %c1_i32 : i32
    %c0_i32_4 = arith.constant 0 : i32
    %9 = arith.cmpi eq, %arg1, %c0_i32_4 : i32
    %10 = arith.andi %8, %9 : i1
    %11 = arith.extui %10 : i1 to i32
    %c0_i32_5 = arith.constant 0 : i32
    %12 = arith.cmpi ne, %11, %c0_i32_5 : i32
    scf.if %12 {
      %c0 = arith.constant 0 : index
      %c0_8 = arith.constant 0 : index
      %16 = vector.load %arg3[%c0, %c0_8] : memref<1x128xf32, #tpu.memory_space<vmem>>, vector<1x128xf32>
      %c0_9 = arith.constant 0 : index
      %c0_10 = arith.constant 0 : index
      %17 = vector.load %arg14[%c0_9, %c0_10] : memref<8x128xf32, #tpu.memory_space<vmem>>, vector<8x128xf32>
      %cst = arith.constant dense<0xFF800000> : vector<128xf32>
      %18 = vector.multi_reduction <maximumf>, %17, %cst [0] : vector<8x128xf32> to vector<128xf32>
      %19 = vector.shape_cast %18 : vector<128xf32> to vector<1x128xf32>
      %c0_11 = arith.constant 0 : index
      %c0_12 = arith.constant 0 : index
      %20 = vector.load %arg15[%c0_11, %c0_12] : memref<8x128xf32, #tpu.memory_space<vmem>>, vector<8x128xf32>
      %cst_13 = arith.constant dense<0xFF800000> : vector<128xf32>
      %21 = vector.multi_reduction <maximumf>, %20, %cst_13 [0] : vector<8x128xf32> to vector<128xf32>
      %22 = vector.shape_cast %21 : vector<128xf32> to vector<1x128xf32>
      %c0_14 = arith.constant 0 : index
      %c0_15 = arith.constant 0 : index
      %23 = vector.load %arg16[%c0_14, %c0_15] : memref<8x128xf32, #tpu.memory_space<vmem>>, vector<8x128xf32>
      %cst_16 = arith.constant dense<0xFF800000> : vector<128xf32>
      %24 = vector.multi_reduction <maximumf>, %23, %cst_16 [0] : vector<8x128xf32> to vector<128xf32>
      %25 = vector.shape_cast %24 : vector<128xf32> to vector<1x128xf32>
      %cst_17 = arith.constant 0.000000e+00 : f32
      %26 = vector.broadcast %cst_17 : f32 to vector<1x128xf32>
      %27 = arith.mulf %26, %16 : vector<1x128xf32>
      %28 = arith.addf %19, %27 : vector<1x128xf32>
      %cst_18 = arith.constant 0.000000e+00 : f32
      %29 = vector.broadcast %cst_18 : f32 to vector<1x128xf32>
      %30 = arith.mulf %29, %16 : vector<1x128xf32>
      %31 = arith.mulf %30, %16 : vector<1x128xf32>
      %32 = arith.subf %22, %31 : vector<1x128xf32>
      %33 = tpu.iota {dimensions = array<i32: 0>} : vector<128x32xi32>
      %c32_i32 = arith.constant 32 : i32
      %c0_i32_19 = arith.constant 0 : i32
      %34 = arith.cmpi eq, %c32_i32, %c0_i32_19 : i32
      %c1_i32_20 = arith.constant 1 : i32
      %35 = arith.select %34, %c1_i32_20, %c32_i32 : i32
      %36 = vector.broadcast %35 : i32 to vector<128x32xi32>
      %37 = arith.remsi %33, %36 : vector<128x32xi32>
      %c0_i32_21 = arith.constant 0 : i32
      %38 = vector.broadcast %c0_i32_21 : i32 to vector<128x32xi32>
      %39 = arith.cmpi ne, %37, %38 : vector<128x32xi32>
      %c0_i32_22 = arith.constant 0 : i32
      %40 = vector.broadcast %c0_i32_22 : i32 to vector<128x32xi32>
      %41 = arith.cmpi slt, %37, %40 : vector<128x32xi32>
      %c0_i32_23 = arith.constant 0 : i32
      %42 = arith.cmpi slt, %35, %c0_i32_23 : i32
      %43 = vector.broadcast %42 : i1 to vector<128x32xi1>
      %44 = vector.broadcast %43 : vector<128x32xi1> to vector<128x32xi1>
      %45 = arith.xori %41, %44 : vector<128x32xi1>
      %46 = arith.andi %45, %39 : vector<128x32xi1>
      %47 = vector.broadcast %35 : i32 to vector<128x32xi32>
      %48 = arith.addi %37, %47 : vector<128x32xi32>
      %49 = arith.select %46, %48, %37 : vector<128x32xi1>, vector<128x32xi32>
      %50 = tpu.iota {dimensions = array<i32: 1>} : vector<128x32xi32>
      %51 = arith.cmpi eq, %49, %50 : vector<128x32xi32>
      %52 = arith.extui %51 : vector<128x32xi1> to vector<128x32xi32>
      %53 = arith.sitofp %52 : vector<128x32xi32> to vector<128x32xf32>
      %cst_24 = arith.constant dense<0.000000e+00> : vector<1x32xf32>
      %54 = tpu.matmul %28, %53, %cst_24 {dimension_numbers = #tpu.dot_dimension_numbers<[1], [0], [0], [1], [0, 0, 1, 1], [], []>} : vector<1x128xf32>, vector<128x32xf32>, vector<1x32xf32> -> vector<1x32xf32>
      %cst_25 = arith.constant dense<0.000000e+00> : vector<1x32xf32>
      %55 = tpu.matmul %32, %53, %cst_25 {dimension_numbers = #tpu.dot_dimension_numbers<[1], [0], [0], [1], [0, 0, 1, 1], [], []>} : vector<1x128xf32>, vector<128x32xf32>, vector<1x32xf32> -> vector<1x32xf32>
      %cst_26 = arith.constant dense<0.000000e+00> : vector<1x32xf32>
      %56 = tpu.matmul %25, %53, %cst_26 {dimension_numbers = #tpu.dot_dimension_numbers<[1], [0], [0], [1], [0, 0, 1, 1], [], []>} : vector<1x128xf32>, vector<128x32xf32>, vector<1x32xf32> -> vector<1x32xf32>
      %cst_27 = arith.constant 5.000000e-01 : f32
      %57 = vector.broadcast %cst_27 : f32 to vector<1x32xf32>
      %58 = arith.cmpf ogt, %56, %57 : vector<1x32xf32>
      %c0_28 = arith.constant 0 : index
      %c0_29 = arith.constant 0 : index
      %59 = vector.load %arg4[%c0_28, %c0_29] : memref<1x32xf32, #tpu.memory_space<vmem>>, vector<1x32xf32>
      %cst_30 = arith.constant 3.200000e+01 : f32
      %60 = vector.broadcast %cst_30 : f32 to vector<1x32xf32>
      %61 = arith.divf %54, %60 : vector<1x32xf32>
      %62 = arith.addf %59, %61 : vector<1x32xf32>
      %cst_31 = arith.constant 3.200000e+01 : f32
      %63 = vector.broadcast %cst_31 : f32 to vector<1x32xf32>
      %64 = arith.divf %55, %63 : vector<1x32xf32>
      %cst_32 = arith.constant 3.200000e+01 : f32
      %65 = vector.broadcast %cst_32 : f32 to vector<1x32xf32>
      %66 = arith.divf %54, %65 : vector<1x32xf32>
      %67 = arith.mulf %66, %66 : vector<1x32xf32>
      %68 = arith.subf %64, %67 : vector<1x32xf32>
      %c0_33 = arith.constant 0 : index
      %c0_34 = arith.constant 0 : index
      %69 = vector.load %arg5[%c0_33, %c0_34] : memref<1x32xf32, #tpu.memory_space<vmem>>, vector<1x32xf32>
      %c0_35 = arith.constant 0 : index
      %c0_36 = arith.constant 0 : index
      %70 = vector.load %arg6[%c0_35, %c0_36] : memref<1x32xf32, #tpu.memory_space<vmem>>, vector<1x32xf32>
      %c0_37 = arith.constant 0 : index
      %c0_38 = arith.constant 0 : index
      %71 = vector.load %arg7[%c0_37, %c0_38] : memref<1x32xf32, #tpu.memory_space<vmem>>, vector<1x32xf32>
      %c0_39 = arith.constant 0 : index
      %72 = memref.load %arg2[%c0_39] : memref<1xi32, #tpu.memory_space<smem>>
      %73 = arith.sitofp %72 : i32 to f32
      %cst_40 = arith.constant 3.200000e+01 : f32
      %74 = arith.addf %73, %cst_40 : f32
      %75 = arith.subf %62, %69 : vector<1x32xf32>
      %cst_41 = arith.constant 3.200000e+01 : f32
      %76 = arith.divf %cst_41, %74 : f32
      %77 = vector.broadcast %76 : f32 to vector<1x32xf32>
      %78 = arith.mulf %75, %77 : vector<1x32xf32>
      %79 = arith.addf %69, %78 : vector<1x32xf32>
      %80 = vector.broadcast %73 : f32 to vector<1x32xf32>
      %81 = arith.mulf %70, %80 : vector<1x32xf32>
      %cst_42 = arith.constant 3.200000e+01 : f32
      %82 = vector.broadcast %cst_42 : f32 to vector<1x32xf32>
      %83 = arith.mulf %68, %82 : vector<1x32xf32>
      %84 = arith.addf %81, %83 : vector<1x32xf32>
      %85 = arith.mulf %75, %75 : vector<1x32xf32>
      %cst_43 = arith.constant 3.200000e+01 : f32
      %86 = arith.mulf %73, %cst_43 : f32
      %87 = arith.divf %86, %74 : f32
      %88 = vector.broadcast %87 : f32 to vector<1x32xf32>
      %89 = arith.mulf %85, %88 : vector<1x32xf32>
      %90 = arith.addf %84, %89 : vector<1x32xf32>
      %91 = vector.broadcast %74 : f32 to vector<1x32xf32>
      %92 = arith.divf %90, %91 : vector<1x32xf32>
      %cst_44 = arith.constant 0.00999999977 : f32
      %cst_45 = arith.constant 1.000000e+03 : f32
      %93 = vector.broadcast %cst_44 : f32 to vector<1x32xf32>
      %94 = arith.maximumf %93, %92 : vector<1x32xf32>
      %95 = vector.broadcast %cst_45 : f32 to vector<1x32xf32>
      %96 = arith.minimumf %95, %94 : vector<1x32xf32>
      %97 = arith.extui %58 : vector<1x32xi1> to vector<1x32xi32>
      %98 = arith.sitofp %97 : vector<1x32xi32> to vector<1x32xf32>
      %cst_46 = arith.constant 1.000000e+00 : f32
      %99 = vector.broadcast %cst_46 : f32 to vector<1x32xf32>
      %100 = arith.subf %99, %98 : vector<1x32xf32>
      %101 = arith.mulf %71, %100 : vector<1x32xf32>
      %cst_47 = arith.constant 5.000000e-01 : f32
      %102 = vector.broadcast %cst_47 : f32 to vector<1x32xf32>
      %103 = arith.cmpf ogt, %101, %102 : vector<1x32xf32>
      %104 = arith.select %103, %69, %79 : vector<1x32xi1>, vector<1x32xf32>
      %105 = arith.select %103, %70, %96 : vector<1x32xi1>, vector<1x32xf32>
      %c0_48 = arith.constant 0 : index
      %c0_49 = arith.constant 0 : index
      %106 = vector.load %arg10[%c0_48, %c0_49] : memref<1x32xf32, #tpu.memory_space<vmem>>, vector<1x32xf32>
      tpu.vector_store %arg10[%c0_48, %c0_49], %104 {strides = array<i32>} : memref<1x32xf32, #tpu.memory_space<vmem>>, vector<1x32xf32>,
      %c0_50 = arith.constant 0 : index
      %c0_51 = arith.constant 0 : index
      %107 = vector.load %arg11[%c0_50, %c0_51] : memref<1x32xf32, #tpu.memory_space<vmem>>, vector<1x32xf32>
      tpu.vector_store %arg11[%c0_50, %c0_51], %105 {strides = array<i32>} : memref<1x32xf32, #tpu.memory_space<vmem>>, vector<1x32xf32>,
      %c0_52 = arith.constant 0 : index
      %c0_53 = arith.constant 0 : index
      %108 = vector.load %arg12[%c0_52, %c0_53] : memref<1x32xf32, #tpu.memory_space<vmem>>, vector<1x32xf32>
      tpu.vector_store %arg12[%c0_52, %c0_53], %101 {strides = array<i32>} : memref<1x32xf32, #tpu.memory_space<vmem>>, vector<1x32xf32>,
      %cst_54 = arith.constant 9.99999993E-9 : f32
      %109 = vector.broadcast %cst_54 : f32 to vector<1x32xf32>
      %110 = arith.addf %105, %109 : vector<1x32xf32>
      %111 = math.rsqrt %110 : vector<1x32xf32>
      %112 = arith.mulf %104, %111 : vector<1x32xf32>
      %113 = tpu.iota {dimensions = array<i32: 0>} : vector<32x128xi32>
      %114 = tpu.iota {dimensions = array<i32: 1>} : vector<32x128xi32>
      %c32_i32_55 = arith.constant 32 : i32
      %c0_i32_56 = arith.constant 0 : i32
      %115 = arith.cmpi eq, %c32_i32_55, %c0_i32_56 : i32
      %c1_i32_57 = arith.constant 1 : i32
      %116 = arith.select %115, %c1_i32_57, %c32_i32_55 : i32
      %117 = vector.broadcast %116 : i32 to vector<32x128xi32>
      %118 = arith.remsi %114, %117 : vector<32x128xi32>
      %c0_i32_58 = arith.constant 0 : i32
      %119 = vector.broadcast %c0_i32_58 : i32 to vector<32x128xi32>
      %120 = arith.cmpi ne, %118, %119 : vector<32x128xi32>
      %c0_i32_59 = arith.constant 0 : i32
      %121 = vector.broadcast %c0_i32_59 : i32 to vector<32x128xi32>
      %122 = arith.cmpi slt, %118, %121 : vector<32x128xi32>
      %c0_i32_60 = arith.constant 0 : i32
      %123 = arith.cmpi slt, %116, %c0_i32_60 : i32
      %124 = vector.broadcast %123 : i1 to vector<32x128xi1>
      %125 = vector.broadcast %124 : vector<32x128xi1> to vector<32x128xi1>
      %126 = arith.xori %122, %125 : vector<32x128xi1>
      %127 = arith.andi %126, %120 : vector<32x128xi1>
      %128 = vector.broadcast %116 : i32 to vector<32x128xi32>
      %129 = arith.addi %118, %128 : vector<32x128xi32>
      %130 = arith.select %127, %129, %118 : vector<32x128xi1>, vector<32x128xi32>
      %131 = arith.cmpi eq, %113, %130 : vector<32x128xi32>
      %132 = arith.extui %131 : vector<32x128xi1> to vector<32x128xi32>
      %133 = arith.sitofp %132 : vector<32x128xi32> to vector<32x128xf32>
      %cst_61 = arith.constant dense<0.000000e+00> : vector<1x128xf32>
      %134 = tpu.matmul %111, %133, %cst_61 {dimension_numbers = #tpu.dot_dimension_numbers<[1], [0], [0], [1], [0, 0, 1, 1], [], []>} : vector<1x32xf32>, vector<32x128xf32>, vector<1x128xf32> -> vector<1x128xf32>
      %c0_62 = arith.constant 0 : index
      %c0_63 = arith.constant 0 : index
      %135 = vector.load %arg17[%c0_62, %c0_63] : memref<1x128xf32, #tpu.memory_space<vmem>>, vector<1x128xf32>
      tpu.vector_store %arg17[%c0_62, %c0_63], %134 {strides = array<i32>} : memref<1x128xf32, #tpu.memory_space<vmem>>, vector<1x128xf32>,
      %cst_64 = arith.constant dense<0.000000e+00> : vector<1x128xf32>
      %136 = tpu.matmul %112, %133, %cst_64 {dimension_numbers = #tpu.dot_dimension_numbers<[1], [0], [0], [1], [0, 0, 1, 1], [], []>} : vector<1x32xf32>, vector<32x128xf32>, vector<1x128xf32> -> vector<1x128xf32>
      %c0_65 = arith.constant 0 : index
      %c0_66 = arith.constant 0 : index
      %137 = vector.load %arg18[%c0_65, %c0_66] : memref<1x128xf32, #tpu.memory_space<vmem>>, vector<1x128xf32>
      tpu.vector_store %arg18[%c0_65, %c0_66], %136 {strides = array<i32>} : memref<1x128xf32, #tpu.memory_space<vmem>>, vector<1x128xf32>,
    } else {
    }
    %c1_i32_6 = arith.constant 1 : i32
    %13 = arith.cmpi eq, %arg0, %c1_i32_6 : i32
    %14 = arith.extui %13 : i1 to i32
    %c0_i32_7 = arith.constant 0 : i32
    %15 = arith.cmpi ne, %14, %c0_i32_7 : i32
    scf.if %15 {
      %c8_i32 = arith.constant 8 : i32
      %16 = arith.muli %arg1, %c8_i32 : i32
      %17 = tpu.assume_multiple %16, 8 : i32
      %18 = arith.index_cast %17 : i32 to index
      %c0 = arith.constant 0 : index
      %19 = vector.load %arg13[%18, %c0] : memref<8x128xf32, #tpu.memory_space<vmem>>, vector<8x128xf32>
      %c0_8 = arith.constant 0 : index
      %c0_9 = arith.constant 0 : index
      %20 = vector.load %arg17[%c0_8, %c0_9] : memref<1x128xf32, #tpu.memory_space<vmem>>, vector<1x128xf32>
      %21 = vector.broadcast %20 : vector<1x128xf32> to vector<8x128xf32>
      %22 = arith.mulf %19, %21 : vector<8x128xf32>
      %c0_10 = arith.constant 0 : index
      %c0_11 = arith.constant 0 : index
      %23 = vector.load %arg18[%c0_10, %c0_11] : memref<1x128xf32, #tpu.memory_space<vmem>>, vector<1x128xf32>
      %24 = vector.broadcast %23 : vector<1x128xf32> to vector<8x128xf32>
      %25 = arith.subf %22, %24 : vector<8x128xf32>
      %cst = arith.constant -1.000000e+01 : f32
      %cst_12 = arith.constant 1.000000e+01 : f32
      %26 = vector.broadcast %cst : f32 to vector<8x128xf32>
      %27 = arith.maximumf %26, %25 : vector<8x128xf32>
      %28 = vector.broadcast %cst_12 : f32 to vector<8x128xf32>
      %29 = arith.minimumf %28, %27 : vector<8x128xf32>
      %c0_13 = arith.constant 0 : index
      %c0_14 = arith.constant 0 : index
      %30 = vector.load %arg9[%c0_13, %c0_14] : memref<8x128xf32, #tpu.memory_space<vmem>>, vector<8x128xf32>
      tpu.vector_store %arg9[%c0_13, %c0_14], %29 {strides = array<i32>} : memref<8x128xf32, #tpu.memory_space<vmem>>, vector<8x128xf32>,
    } else {
    }
    return
  }
  func.func @transform_0(%arg0: i32, %arg1: i32, %arg2: memref<1xi32, #tpu.memory_space<smem>>) -> (i32, i32) {
    %c0_i32 = arith.constant 0 : i32
    %c0_i32_0 = arith.constant 0 : i32
    %c0_i32_1 = arith.constant 0 : i32
    return %c0_i32, %c0_i32_0 : i32, i32
  }
  func.func @transform_1(%arg0: i32, %arg1: i32, %arg2: memref<1xi32, #tpu.memory_space<smem>>) -> (i32, i32) {
    %c0_i32 = arith.constant 0 : i32
    %c0_i32_0 = arith.constant 0 : i32
    %c0_i32_1 = arith.constant 0 : i32
    return %c0_i32, %c0_i32_0 : i32, i32
  }
  func.func @transform_2(%arg0: i32, %arg1: i32, %arg2: memref<1xi32, #tpu.memory_space<smem>>) -> (i32, i32) {
    %c0_i32 = arith.constant 0 : i32
    %c0_i32_0 = arith.constant 0 : i32
    %c0_i32_1 = arith.constant 0 : i32
    return %c0_i32, %c0_i32_0 : i32, i32
  }
  func.func @transform_3(%arg0: i32, %arg1: i32, %arg2: memref<1xi32, #tpu.memory_space<smem>>) -> (i32, i32) {
    %c0_i32 = arith.constant 0 : i32
    %c0_i32_0 = arith.constant 0 : i32
    %c0_i32_1 = arith.constant 0 : i32
    return %c0_i32, %c0_i32_0 : i32, i32
  }
  func.func @transform_4(%arg0: i32, %arg1: i32, %arg2: memref<1xi32, #tpu.memory_space<smem>>) -> (i32, i32) {
    %c0_i32 = arith.constant 0 : i32
    %c0_i32_0 = arith.constant 0 : i32
    %c0_i32_1 = arith.constant 0 : i32
    return %c0_i32, %c0_i32_0 : i32, i32
  }
  func.func @transform_5(%arg0: i32, %arg1: i32, %arg2: memref<1xi32, #tpu.memory_space<smem>>) -> (i32, i32) {
    %c1_i32 = arith.constant 1 : i32
    %0 = arith.subi %c1_i32, %arg0 : i32
    %1 = arith.muli %0, %arg1 : i32
    %c0_i32 = arith.constant 0 : i32
    %2 = arith.muli %arg0, %c0_i32 : i32
    %3 = arith.addi %1, %2 : i32
    %c0_i32_0 = arith.constant 0 : i32
    %c0_i32_1 = arith.constant 0 : i32
    return %3, %c0_i32_0 : i32, i32
  }
  func.func @transform_6(%arg0: i32, %arg1: i32, %arg2: memref<1xi32, #tpu.memory_space<smem>>) -> (i32, i32) {
    %0 = arith.muli %arg0, %arg1 : i32
    %c0_i32 = arith.constant 0 : i32
    %c0_i32_0 = arith.constant 0 : i32
    return %0, %c0_i32 : i32, i32
  }
  func.func @transform_7(%arg0: i32, %arg1: i32, %arg2: memref<1xi32, #tpu.memory_space<smem>>) -> (i32, i32) {
    %c0_i32 = arith.constant 0 : i32
    %c0_i32_0 = arith.constant 0 : i32
    %c0_i32_1 = arith.constant 0 : i32
    return %c0_i32, %c0_i32_0 : i32, i32
  }
  func.func @transform_8(%arg0: i32, %arg1: i32, %arg2: memref<1xi32, #tpu.memory_space<smem>>) -> (i32, i32) {
    %c0_i32 = arith.constant 0 : i32
    %c0_i32_0 = arith.constant 0 : i32
    %c0_i32_1 = arith.constant 0 : i32
    return %c0_i32, %c0_i32_0 : i32, i32
  }
  func.func @transform_9(%arg0: i32, %arg1: i32, %arg2: memref<1xi32, #tpu.memory_space<smem>>) -> (i32, i32) {
    %c0_i32 = arith.constant 0 : i32
    %c0_i32_0 = arith.constant 0 : i32
    %c0_i32_1 = arith.constant 0 : i32
    return %c0_i32, %c0_i32_0 : i32, i32
  }
}

</mosaic_0001>

<llo_original>
// kernel: tpu_custom_call.1
$region0: #{tpu_custom_call.1}
  #allocation0 [shape = 'u32[]', space=smem, size = 0x4, offset = 0x4, fixed_abs, tag = 'smem constant byte address 0x4 - core index']
  #allocation1 [shape = 'u32[144,128]{1,0:T(1,128)}', space=vmem, size = 0x12000, scoped, tag = 'internal scratch']
  #allocation2 [shape = 'f32[8,128]{1,0:T(8,128)}', space=vmem, size = 0x1000, scoped, tag = 'scratch operand']
  #allocation3 [shape = 'f32[8,128]{1,0:T(8,128)}', space=vmem, size = 0x1000, scoped, tag = 'scratch operand']
  #allocation4 [shape = 'f32[8,128]{1,0:T(8,128)}', space=vmem, size = 0x1000, scoped, tag = 'scratch operand']
  #allocation5 [shape = 'f32[8,128]{1,0:T(8,128)}', space=vmem, size = 0x1000, scoped, tag = 'scratch operand']
  #allocation6 [shape = 'f32[1,128]{1,0:T(1,128)}', space=vmem, size = 0x200, scoped, tag = 'scratch operand']
  #allocation7 [shape = 'f32[1,128]{1,0:T(1,128)}', space=vmem, size = 0x200, scoped, tag = 'scratch operand']
  #allocation8 [shape = 's32[1]{0}', space=sflag, size = 0x4, scoped, tag = 'scoped memory for tpu_custom_call.1']
  #allocation9 [shape = 's32[1]{0:T(128)S(6)}', space=smem, size = 0x200, scoped, tag = 'prefetched SMEM operand 0']
  %s0 = inlined_call_operand.<no memory space> [shape: s32[1], index: 0, kind: input, shape index: {}]
  %s1 = inlined_call_operand.vmem [shape: f32[1,128], index: 1, kind: input, shape index: {}]
  %s2 = inlined_call_operand.vmem [shape: f32[1,32], index: 2, kind: input, shape index: {}]
  %s3 = inlined_call_operand.vmem [shape: f32[1,32], index: 3, kind: input, shape index: {}]
  %s4 = inlined_call_operand.hbm [shape: f32[1,32], index: 4, kind: input, shape index: {}]
  %s5 = inlined_call_operand.hbm [shape: f32[1,32], index: 5, kind: input, shape index: {}]
  %s6 = inlined_call_operand.vmem [shape: f32[8,128], index: 6, kind: input, shape index: {}]
  %s7 = inlined_call_operand.hbm [shape: f32[8,128], index: 7, kind: output, shape index: {0}]
  %s8 = inlined_call_operand.hbm [shape: f32[1,32], index: 8, kind: output, shape index: {1}]
  %s9 = inlined_call_operand.hbm [shape: f32[1,32], index: 9, kind: output, shape index: {2}]
  %s10 = inlined_call_operand.hbm [shape: f32[1,32], index: 10, kind: output, shape index: {3}]
  %11 = xla_tuple %s7, %s8, %s9, %s10
  %s12 = sld [smem:[#allocation0]]
  $region105: #{tpu_custom_call.1} parent=0
    _
  %s14 = ssub.s32 1, %s12
  %s15 = scalar_select 0, %s14, %s12
  %16 = sst [smem:[#allocation9]] %s0
  $region1: #{tpu_custom_call.1} parent=0
    #allocation10 [shape = 'u8[512]{0}', space=vmem, size = 0x400, scoped, tag = 'input window, operand 4, single buffered']
    #allocation11 [shape = 's32[2]{0}', space=sflag, size = 0x8, scoped, tag = 'scoped memory for tpu_custom_call.1']
    #allocation12 [shape = 's32[2]{0}', space=sflag, size = 0x8, scoped, tag = 'scoped memory for tpu_custom_call.1']
    #allocation13 [shape = 'u8[512]{0}', space=vmem, size = 0x400, scoped, tag = 'input window, operand 5, single buffered']
    #allocation14 [shape = 's32[1]{0}', space=sflag, size = 0x4, scoped, tag = 'scoped memory for tpu_custom_call.1']
    #allocation15 [shape = 'u8[8192]{0}', space=vmem, size = 0x2000, scoped, tag = 'output window, operand 0']
    #allocation16 [shape = 'u8[512]{0}', space=vmem, size = 0x400, scoped, tag = 'output window, operand 1, single buffered']
    #allocation17 [shape = 's32[1]{0}', space=sflag, size = 0x4, scoped, tag = 'scoped memory for tpu_custom_call.1']
    #allocation18 [shape = 'u8[512]{0}', space=vmem, size = 0x400, scoped, tag = 'output window, operand 2, single buffered']
    #allocation19 [shape = 'u8[512]{0}', space=vmem, size = 0x400, scoped, tag = 'output window, operand 3, single buffered']
    #allocation20 [shape = 's32[1]{0}', space=sflag, size = 0x4, scoped, tag = 'scoped memory for tpu_custom_call.1']
    %17 = vsyncpa [#allocation11], 0
    %18 = vsyncpa [#allocation14], 0
    %19 = vsyncpa [#allocation12], 0
    %s20 = scalar_lea.sflag [#allocation12], 1
    %21 = vsyncpa %s20, 0
    %22 = vsyncpa [#allocation17], 0
    %23 = vsyncpa [#allocation20], 0
    loop: start=0, step=1, limit=4
    $region2: #{tpu_custom_call.1} parent=1 // loop_pre_header
      _
    $region3: #{tpu_custom_call.1} parent=1 // loop_header
      %s25 = sphi 0, %s29
      %p26 = scmp.ge.s32.totalorder %s25, 4
      %s32 = sphi 0, %s44
      %s33 = sphi 0, %s40
      %s34 = sphi 0, %s32
      %s35 = sphi 0, %s33
      %s36 = sphi 0, %s34
      %s37 = sphi 0, %s35
      %s45 = sphi 0, %s45
      %s47 = sphi 0, %s45
      %s48 = sphi 0, %s47
      %s62 = sphi 0, %s48
      %s66 = sphi 0, %s66
      %s68 = sphi 0, %s66
      %s69 = sphi 0, %s68
      %s83 = sphi 0, %s69
      %s87 = sphi 0, %s87
      %s89 = sphi 0, %s87
      %s90 = sphi 0, %s89
      %s104 = sphi 0, %s90
      %s108 = sphi 0, %s108
      %s110 = sphi 0, %s108
      %s111 = sphi 0, %s110
      %s125 = sphi 0, %s111
      %s129 = sphi 0, %s129
      %s131 = sphi 0, %s129
      %s132 = sphi 0, %s131
      %s146 = sphi 0, %s132
      %s156 = sphi 0, %s158
      %s159 = sphi 0, %s156
      %s160 = sphi 0, %s159
      %s176 = sphi 0, %s160
      %s184 = sphi 0, %s186
      %s187 = sphi 0, %s184
      %s188 = sphi 0, %s187
      %s204 = sphi 0, %s188
      %s208 = sphi 0, %s208
      %s210 = sphi 0, %s208
      %s211 = sphi 0, %s210
      %s225 = sphi 0, %s211
      %s229 = sphi 0, %s229
      %s231 = sphi 0, %s229
      %s232 = sphi 0, %s231
      %s246 = sphi 0, %s232
      %s250 = sphi 0, %s250
      %s252 = sphi 0, %s250
      %s253 = sphi 0, %s252
      %s267 = sphi 0, %s253
    $region4: #{tpu_custom_call.1} parent=1 // loop_header_branch
      %28 = sbr.rel (%p26) target = $region8
    $region5: #{tpu_custom_call.1} parent=1 // loop_body
      %s30 = ssub.s32 %s25, 1
      %s31 = ssub.s32 %s25, 2
      %s38 = sadd.s32 1, %s33
      %p39 = scmp.ge.s32.totalorder %s38, 1
      %s40 = scalar_select %p39, 0, %s38
      %s41 = sadd.s32 1, %s32
      %s42 = scalar_select %p39, %s41, %s32
      %p43 = scmp.ge.s32.totalorder %s42, 2
      %s44 = scalar_select %p43, 0, %s42
      %s46 = sadd.s32 %s45, 1
      %p49 = scmp.eq.s32.totalorder %s25, 1
      %p50 = scmp.ne.s32.totalorder %s45, %s47
      %p51 = scmp.eq.s32.totalorder %s25, 0
      %p52 = por %p50, %p51
      %p53 = scmp.ne.s32.totalorder %s45, %s47
      %p54 = scmp.eq.s32.totalorder %s30, 1
      %p55 = por %p53, %p54
      %p56 = scmp.ne.s32.totalorder %s47, %s48
      %p57 = scmp.eq.s32.totalorder %s30, 0
      %p58 = por %p56, %p57
      %p59 = scmp.ne.s32.totalorder %s47, %s48
      %p60 = scmp.eq.s32.totalorder %s31, 1
      %p61 = por %p59, %p60
      %p63 = scmp.ne.s32.totalorder %s48, %s62
      %p64 = scmp.eq.s32.totalorder %s31, 0
      %p65 = por %p63, %p64
      %s67 = sadd.s32 %s66, 1
      %p70 = scmp.eq.s32.totalorder %s25, 1
      %p71 = scmp.ne.s32.totalorder %s66, %s68
      %p72 = scmp.eq.s32.totalorder %s25, 0
      %p73 = por %p71, %p72
      %p74 = scmp.ne.s32.totalorder %s66, %s68
      %p75 = scmp.eq.s32.totalorder %s30, 1
      %p76 = por %p74, %p75
      %p77 = scmp.ne.s32.totalorder %s68, %s69
      %p78 = scmp.eq.s32.totalorder %s30, 0
      %p79 = por %p77, %p78
      %p80 = scmp.ne.s32.totalorder %s68, %s69
      %p81 = scmp.eq.s32.totalorder %s31, 1
      %p82 = por %p80, %p81
      %p84 = scmp.ne.s32.totalorder %s69, %s83
      %p85 = scmp.eq.s32.totalorder %s31, 0
      %p86 = por %p84, %p85
      %s88 = sadd.s32 %s87, 1
      %p91 = scmp.eq.s32.totalorder %s25, 1
      %p92 = scmp.ne.s32.totalorder %s87, %s89
      %p93 = scmp.eq.s32.totalorder %s25, 0
      %p94 = por %p92, %p93
      %p95 = scmp.ne.s32.totalorder %s87, %s89
      %p96 = scmp.eq.s32.totalorder %s30, 1
      %p97 = por %p95, %p96
      %p98 = scmp.ne.s32.totalorder %s89, %s90
      %p99 = scmp.eq.s32.totalorder %s30, 0
      %p100 = por %p98, %p99
      %p101 = scmp.ne.s32.totalorder %s89, %s90
      %p102 = scmp.eq.s32.totalorder %s31, 1
      %p103 = por %p101, %p102
      %p105 = scmp.ne.s32.totalorder %s90, %s104
      %p106 = scmp.eq.s32.totalorder %s31, 0
      %p107 = por %p105, %p106
      %s109 = sadd.s32 %s108, 1
      %p112 = scmp.eq.s32.totalorder %s25, 1
      %p113 = scmp.ne.s32.totalorder %s108, %s110
      %p114 = scmp.eq.s32.totalorder %s25, 0
      %p115 = por %p113, %p114
      %p116 = scmp.ne.s32.totalorder %s108, %s110
      %p117 = scmp.eq.s32.totalorder %s30, 1
      %p118 = por %p116, %p117
      %p119 = scmp.ne.s32.totalorder %s110, %s111
      %p120 = scmp.eq.s32.totalorder %s30, 0
      %p121 = por %p119, %p120
      %p122 = scmp.ne.s32.totalorder %s110, %s111
      %p123 = scmp.eq.s32.totalorder %s31, 1
      %p124 = por %p122, %p123
      %p126 = scmp.ne.s32.totalorder %s111, %s125
      %p127 = scmp.eq.s32.totalorder %s31, 0
      %p128 = por %p126, %p127
      %s130 = sadd.s32 %s129, 1
      %p133 = scmp.eq.s32.totalorder %s25, 1
      %p134 = scmp.ne.s32.totalorder %s129, %s131
      %p135 = scmp.eq.s32.totalorder %s25, 0
      %p136 = por %p134, %p135
      %p137 = scmp.ne.s32.totalorder %s129, %s131
      %p138 = scmp.eq.s32.totalorder %s30, 1
      %p139 = por %p137, %p138
      %p140 = scmp.ne.s32.totalorder %s131, %s132
      %p141 = scmp.eq.s32.totalorder %s30, 0
      %p142 = por %p140, %p141
      %p143 = scmp.ne.s32.totalorder %s131, %s132
      %p144 = scmp.eq.s32.totalorder %s31, 1
      %p145 = por %p143, %p144
      %p147 = scmp.ne.s32.totalorder %s132, %s146
      %p148 = scmp.eq.s32.totalorder %s31, 0
      %p149 = por %p147, %p148
      %s150 = ssub.s32 1, %s32
      %s151 = smul.u32 %s150, %s33
      %s152 = ssub.s32 1, %s44
      %s153 = smul.u32 %s152, %s40
      %s154 = ssub.s32 %s151, %s153
      %p155 = scmp.eq.s32.totalorder %s154, 0
      %s157 = sadd.s32 %s156, 1
      %s158 = scalar_select %p155, %s156, %s157
      %p161 = pneg %p155
      %p162 = scmp.eq.s32.totalorder %s25, 1
      %p163 = por %p161, %p162
      %p164 = scmp.ne.s32.totalorder %s156, %s159
      %p165 = scmp.eq.s32.totalorder %s25, 0
      %p166 = por %p164, %p165
      %p167 = scmp.ne.s32.totalorder %s156, %s159
      %p168 = scmp.eq.s32.totalorder %s30, 1
      %p169 = por %p167, %p168
      %p170 = scmp.ne.s32.totalorder %s159, %s160
      %p171 = scmp.eq.s32.totalorder %s30, 0
      %p172 = por %p170, %p171
      %p173 = scmp.ne.s32.totalorder %s159, %s160
      %p174 = scmp.eq.s32.totalorder %s31, 1
      %p175 = por %p173, %p174
      %p177 = scmp.ne.s32.totalorder %s160, %s176
      %p178 = scmp.eq.s32.totalorder %s31, 0
      %p179 = por %p177, %p178
      %s180 = smul.u32 %s32, %s33
      %s181 = smul.u32 %s44, %s40
      %s182 = ssub.s32 %s180, %s181
      %p183 = scmp.eq.s32.totalorder %s182, 0
      %s185 = sadd.s32 %s184, 1
      %s186 = scalar_select %p183, %s184, %s185
      %p189 = pneg %p183
      %p190 = scmp.eq.s32.totalorder %s25, 1
      %p191 = por %p189, %p190
      %p192 = scmp.ne.s32.totalorder %s184, %s187
      %p193 = scmp.eq.s32.totalorder %s25, 0
      %p194 = por %p192, %p193
      %p195 = scmp.ne.s32.totalorder %s184, %s187
      %p196 = scmp.eq.s32.totalorder %s30, 1
      %p197 = por %p195, %p196
      %p198 = scmp.ne.s32.totalorder %s187, %s188
      %p199 = scmp.eq.s32.totalorder %s30, 0
      %p200 = por %p198, %p199
      %p201 = scmp.ne.s32.totalorder %s187, %s188
      %p202 = scmp.eq.s32.totalorder %s31, 1
      %p203 = por %p201, %p202
      %p205 = scmp.ne.s32.totalorder %s188, %s204
      %p206 = scmp.eq.s32.totalorder %s31, 0
      %p207 = por %p205, %p206
      %s209 = sadd.s32 %s208, 1
      %p212 = scmp.eq.s32.totalorder %s25, 1
      %p213 = scmp.ne.s32.totalorder %s208, %s210
      %p214 = scmp.eq.s32.totalorder %s25, 0
      %p215 = por %p213, %p214
      %p216 = scmp.ne.s32.totalorder %s208, %s210
      %p217 = scmp.eq.s32.totalorder %s30, 1
      %p218 = por %p216, %p217
      %p219 = scmp.ne.s32.totalorder %s210, %s211
      %p220 = scmp.eq.s32.totalorder %s30, 0
      %p221 = por %p219, %p220
      %p222 = scmp.ne.s32.totalorder %s210, %s211
      %p223 = scmp.eq.s32.totalorder %s31, 1
      %p224 = por %p222, %p223
      %p226 = scmp.ne.s32.totalorder %s211, %s225
      %p227 = scmp.eq.s32.totalorder %s31, 0
      %p228 = por %p226, %p227
      %s230 = sadd.s32 %s229, 1
      %p233 = scmp.eq.s32.totalorder %s25, 1
      %p234 = scmp.ne.s32.totalorder %s229, %s231
      %p235 = scmp.eq.s32.totalorder %s25, 0
      %p236 = por %p234, %p235
      %p237 = scmp.ne.s32.totalorder %s229, %s231
      %p238 = scmp.eq.s32.totalorder %s30, 1
      %p239 = por %p237, %p238
      %p240 = scmp.ne.s32.totalorder %s231, %s232
      %p241 = scmp.eq.s32.totalorder %s30, 0
      %p242 = por %p240, %p241
      %p243 = scmp.ne.s32.totalorder %s231, %s232
      %p244 = scmp.eq.s32.totalorder %s31, 1
      %p245 = por %p243, %p244
      %p247 = scmp.ne.s32.totalorder %s232, %s246
      %p248 = scmp.eq.s32.totalorder %s31, 0
      %p249 = por %p247, %p248
      %s251 = sadd.s32 %s250, 1
      %p254 = scmp.eq.s32.totalorder %s25, 1
      %p255 = scmp.ne.s32.totalorder %s250, %s252
      %p256 = scmp.eq.s32.totalorder %s25, 0
      %p257 = por %p255, %p256
      %p258 = scmp.ne.s32.totalorder %s250, %s252
      %p259 = scmp.eq.s32.totalorder %s30, 1
      %p260 = por %p258, %p259
      %p261 = scmp.ne.s32.totalorder %s252, %s253
      %p262 = scmp.eq.s32.totalorder %s30, 0
      %p263 = por %p261, %p262
      %p264 = scmp.ne.s32.totalorder %s252, %s253
      %p265 = scmp.eq.s32.totalorder %s31, 1
      %p266 = por %p264, %p265
      %p268 = scmp.ne.s32.totalorder %s253, %s267
      %p269 = scmp.eq.s32.totalorder %s31, 0
      %p270 = por %p268, %p269
      %p271 = scmp.le.s32.totalorder 1, %s25
      %p272 = scmp.lt.s32.totalorder %s25, 3
      %p273 = pnand %p271, %p272
      %p274 = pneg %p273
      // Predicated region
      $region9: #{tpu_custom_call.1} parent=5 // pred_check
        _
      $region10: #{tpu_custom_call.1} parent=5 // pred_check_branch
        %276 = sbr.rel (%p273) target = $region12
      $region11: #{tpu_custom_call.1} parent=5 // pred_region
        %s277 = ssub.s32 %s25, 1
        // Predicated region
        $region13: #{tpu_custom_call.1} parent=11 // pred_check
          %p278 = pneg %p58
        $region14: #{tpu_custom_call.1} parent=11 // pred_check_branch
          %280 = sbr.rel (%p278) target = $region16
        $region15: #{tpu_custom_call.1} parent=11 // pred_region
          _
        $region16: #{tpu_custom_call.1} parent=11 // pred_fallthru
          _
        // Predicated region
        $region17: #{tpu_custom_call.1} parent=11 // pred_check
          %p281 = pneg %p79
        $region18: #{tpu_custom_call.1} parent=11 // pred_check_branch
          %283 = sbr.rel (%p281) target = $region20
        $region19: #{tpu_custom_call.1} parent=11 // pred_region
          _
        $region20: #{tpu_custom_call.1} parent=11 // pred_fallthru
          _
        // Predicated region
        $region21: #{tpu_custom_call.1} parent=11 // pred_check
          %p284 = pneg %p100
        $region22: #{tpu_custom_call.1} parent=11 // pred_check_branch
          %286 = sbr.rel (%p284) target = $region24
        $region23: #{tpu_custom_call.1} parent=11 // pred_region
          _
        $region24: #{tpu_custom_call.1} parent=11 // pred_fallthru
          _
        // Predicated region
        $region25: #{tpu_custom_call.1} parent=11 // pred_check
          %p287 = pneg %p121
        $region26: #{tpu_custom_call.1} parent=11 // pred_check_branch
          %289 = sbr.rel (%p287) target = $region28
        $region27: #{tpu_custom_call.1} parent=11 // pred_region
          %s291 = ssub.s32 16, 16
          %292 = vsyncadd [#allocation11], %s291
          %s294 = sshll.u32 [#allocation10], 4
          %s295 = int_to_ptr.vmem [resolvable:$true] %s294
          %297 = dma.hbm_to_vmem [thread:$0]  %s4, 16, %s295, [#allocation11]
        $region28: #{tpu_custom_call.1} parent=11 // pred_fallthru
          _
        // Predicated region
        $region29: #{tpu_custom_call.1} parent=11 // pred_check
          %p298 = pneg %p142
        $region30: #{tpu_custom_call.1} parent=11 // pred_check_branch
          %300 = sbr.rel (%p298) target = $region32
        $region31: #{tpu_custom_call.1} parent=11 // pred_region
          %s302 = ssub.s32 16, 16
          %303 = vsyncadd [#allocation14], %s302
          %s305 = sshll.u32 [#allocation13], 4
          %s306 = int_to_ptr.vmem [resolvable:$true] %s305
          %308 = dma.hbm_to_vmem [thread:$0]  %s5, 16, %s306, [#allocation14]
        $region32: #{tpu_custom_call.1} parent=11 // pred_fallthru
          _
      $region12: #{tpu_custom_call.1} parent=5 // pred_fallthru
        _
      %p309 = scmp.lt.s32.totalorder %s25, 2
      // Predicated region
      $region33: #{tpu_custom_call.1} parent=5 // pred_check
        %p310 = pneg %p309
      $region34: #{tpu_custom_call.1} parent=5 // pred_check_branch
        %312 = sbr.rel (%p310) target = $region36
      $region35: #{tpu_custom_call.1} parent=5 // pred_region
        // Predicated region
        $region37: #{tpu_custom_call.1} parent=35 // pred_check
          %p313 = pneg %p166
        $region38: #{tpu_custom_call.1} parent=35 // pred_check_branch
          %315 = sbr.rel (%p313) target = $region40
        $region39: #{tpu_custom_call.1} parent=35 // pred_region
          %s316 = ssub.s32 1, %s32
          %s317 = smul.u32 %s316, %s33
          %p318 = scmp.lt.s32.totalorder %s317, 0
          %s319 = scalar_select %p318, %s317, 0
          %s320 = smul.addr %s319, 8
          %s321 = scalar_lea.vmem %s6, %s320
          %s322 = ssub.s32 1, %s32
          %s323 = smul.u32 %s322, %s33
        $region40: #{tpu_custom_call.1} parent=35 // pred_fallthru
          _
      $region36: #{tpu_custom_call.1} parent=5 // pred_fallthru
        _
      %p324 = scmp.le.s32.totalorder 1, %s25
      %p325 = scmp.lt.s32.totalorder %s25, 3
      %p326 = pnand %p324, %p325
      %p327 = pneg %p326
      // Predicated region
      $region41: #{tpu_custom_call.1} parent=5 // pred_check
        _
      $region42: #{tpu_custom_call.1} parent=5 // pred_check_branch
        %329 = sbr.rel (%p326) target = $region44
      $region43: #{tpu_custom_call.1} parent=5 // pred_region
        %s330 = ssub.s32 %s25, 1
        // Predicated region
        $region45: #{tpu_custom_call.1} parent=43 // pred_check
          %p331 = pneg %p121
        $region46: #{tpu_custom_call.1} parent=43 // pred_check_branch
          %333 = sbr.rel (%p331) target = $region48
        $region47: #{tpu_custom_call.1} parent=43 // pred_region
          %334 = dma.done [#allocation11], 16
        $region48: #{tpu_custom_call.1} parent=43 // pred_fallthru
          _
        // Predicated region
        $region49: #{tpu_custom_call.1} parent=43 // pred_check
          %p335 = pneg %p142
        $region50: #{tpu_custom_call.1} parent=43 // pred_check_branch
          %337 = sbr.rel (%p335) target = $region52
        $region51: #{tpu_custom_call.1} parent=43 // pred_region
          %338 = dma.done [#allocation14], 16
        $region52: #{tpu_custom_call.1} parent=43 // pred_fallthru
          _
        %p339 = pneg %p58
        %p340 = pneg %p55
        %p341 = pneg %p79
        %p342 = pneg %p76
        %p343 = pneg %p100
        %p344 = pneg %p97
        %p345 = pneg %p121
        %p346 = pneg %p118
        %p347 = pneg %p142
        %p348 = pneg %p139
        %s349 = ssub.s32 1, %s34
        %s350 = smul.u32 %s349, %s35
        %p351 = scmp.lt.s32.totalorder %s350, 0
        %s352 = scalar_select %p351, %s350, 0
        %s353 = smul.addr %s352, 8
        %s354 = scalar_lea.vmem %s6, %s353
        %p355 = pneg %p172
        %p356 = pneg %p169
        %p357 = pneg %p200
        %p358 = pneg %p197
        %s359 = sand.u32 %s187, 1
        %s360 = scalar_lea.sflag [#allocation12], %s359
        %s361 = sand.u32 %s187, 1
        %s362 = smul.addr %s361, 8
        %s363 = scalar_lea.vmem [#allocation15], %s362
        %p364 = pneg %p221
        %p365 = pneg %p218
        %p366 = pneg %p242
        %p367 = pneg %p239
        %p368 = pneg %p263
        %p369 = pneg %p260
        %s370 = ssub.s32 1, %s34
        %s371 = smul.u32 %s370, %s35
        %p372 = scmp.lt.s32.totalorder %s371, 0
        %s373 = scalar_select %p372, %s371, 0
        %s374 = smul.addr %s373, 8
        %s375 = scalar_lea.vmem %s6, %s374
        %s376 = ssub.s32 1, %s34
        %s377 = smul.u32 %s376, %s35
        %s378 = smul.u32 %s34, %s35
        %p379 = scmp.eq.s32.totalorder %s34, 0
        %p380 = scmp.eq.s32.totalorder %s35, 0
        %p381 = pnand %p379, %p380
        %p382 = pneg %p381
        // Predicated region
        $region53: #{tpu_custom_call.1} parent=43 // pred_check
          _
        $region54: #{tpu_custom_call.1} parent=43 // pred_check_branch
          %384 = sbr.rel (%p381) target = $region56
        $region55: #{tpu_custom_call.1} parent=43 // pred_region
          %385 = vst [vmem:[#allocation3] sm:$0xff] 0.0
          %386 = vst [vmem:[#allocation4] sm:$0xff] 0.0
          %387 = vst [vmem:[#allocation5] sm:$0xff] 0.0
        $region56: #{tpu_custom_call.1} parent=43 // pred_fallthru
          _
        // Predicated region
        $region57: #{tpu_custom_call.1} parent=43 // pred_check
          %p388 = pneg %p379
        $region58: #{tpu_custom_call.1} parent=43 // pred_check_branch
          %390 = sbr.rel (%p388) target = $region60
        $region59: #{tpu_custom_call.1} parent=43 // pred_region
          %s391 = smul.u32 %s35, 8
          %v392 = vld [vmem:[%s375] sm:$0xff]
          %s393 = scalar_lea.vmem [#allocation2], %s391
          %394 = vst [vmem:[%s393] sm:$0xff] %v392
          %v395 = vlaneseq
          %v396 = vshrl.u32 %v395, 7
          %s397 = ssub.s32 8, %s391
          %v398 = vstv %s397
          %vm399 = vcmp.lt.s32.totalorder %v396, %v398
          %v400 = vsel %vm399, 1, 0
          %vm401 = vcmp.eq.s32.totalorder %v400, 1
          %v402 = vsel %vm401, %v392, 0.0
          %v403 = vmul.f32 %v402, %v402
          %v404 = vsub.f32 %v403, 1.0
          %v405 = vmul.f32 %v402, %v404
          %vm406 = vcmp.ne.f32.partialorder %v405, 0.0
          %v407 = vsel %vm406, 1.0, 0.0
          %v408 = vrot.slane %v407, 4
          %v409 = vmax.f32 %v407, %v408
          %v410 = vrot.slane %v409, 2
          %v411 = vmax.f32 %v409, %v410
          %v412 = vrot.slane %v411, 1
          %v413 = vmax.f32 %v411, %v412
          %vm414 = vcmp.gt.f32.partialorder %v413, 0.0
          %v415 = vld [vmem:[#allocation5] sm:$0xff]
          %v416 = vsel %vm414, 1, 0
          %v417 = vcvt.s32.f32 %v416
          %v418 = vmax.f32 %v415, %v417
          %419 = vst [vmem:[#allocation5] sm:$0xff] %v418
          %v420 = vld [vmem:[%s1] sm:$0x1]
          %v422 = vlaneseq
          %v423 = vshrl.u32 %v422, 7
          %v424 = vsub.s32 0, %v423
          %v425 = vrot.slane %v420, %v424
          %v427 = vsub.f32 %v402, %v425
          %v428 = vld [vmem:[#allocation3] sm:$0xff]
          %vm429 = vcmask 64512
          %v431 = vsel %vm429, 1.0, 0
          %433 = vmatprep.subr.mxu0 0.0
          %434 = vmatpush1.msra.mxu0 0.0
          %435 = vmatprep.subr.mxu0 0.0
          %436 = vmatpush1.msra.mxu0 0.0
          %437 = vmatprep.subr.mxu0 0.0
          %438 = vmatpush1.msra.mxu0 0.0
          %439 = vmatprep.subr.mxu0 0.0
          %440 = vmatpush1.msra.mxu0 0.0
          %441 = vmatprep.subr.mxu0 0.0
          %442 = vmatpush1.msra.mxu0 0.0
          %443 = vmatprep.subr.mxu0 0.0
          %444 = vmatpush1.msra.mxu0 0.0
          %445 = vmatprep.subr.mxu0 0.0
          %446 = vmatpush1.msra.mxu0 0.0
          %447 = vmatprep.subr.mxu0 0.0
          %448 = vmatpush1.msra.mxu0 0.0
          %449 = vmatprep.subr.mxu0 0.0
          %450 = vmatpush1.msra.mxu0 0.0
          %451 = vmatprep.subr.mxu0 0.0
          %452 = vmatpush1.msra.mxu0 0.0
          %453 = vmatprep.subr.mxu0 0.0
          %454 = vmatpush1.msra.mxu0 0.0
          %455 = vmatprep.subr.mxu0 0.0
          %456 = vmatpush1.msra.mxu0 0.0
          %457 = vmatprep.subr.mxu0 0.0
          %458 = vmatpush1.msra.mxu0 0.0
          %459 = vmatprep.subr.mxu0 0.0
          %460 = vmatpush1.msra.mxu0 0.0
          %461 = vmatprep.subr.mxu0 0.0
          %462 = vmatpush1.msra.mxu0 0.0
          %463 = vmatprep.subr.mxu0 0.0
          %464 = vmatpush1.msra.mxu0 %v427
          %465 = vmatprep.subr.mxu0 0.0
          %466 = vmatpush2.msra.mxu0 0.0
          %467 = vmatprep.subr.mxu0 0.0
          %468 = vmatpush2.msra.mxu0 0.0
          %469 = vmatprep.subr.mxu0 0.0
          %470 = vmatpush2.msra.mxu0 0.0
          %471 = vmatprep.subr.mxu0 0.0
          %472 = vmatpush2.msra.mxu0 0.0
          %473 = vmatprep.subr.mxu0 0.0
          %474 = vmatpush2.msra.mxu0 0.0
          %475 = vmatprep.subr.mxu0 0.0
          %476 = vmatpush2.msra.mxu0 0.0
          %477 = vmatprep.subr.mxu0 0.0
          %478 = vmatpush2.msra.mxu0 0.0
          %479 = vmatprep.subr.mxu0 0.0
          %480 = vmatpush2.msra.mxu0 0.0
          %481 = vmatprep.subr.mxu0 0.0
          %482 = vmatpush2.msra.mxu0 0.0
          %483 = vmatprep.subr.mxu0 0.0
          %484 = vmatpush2.msra.mxu0 0.0
          %485 = vmatprep.subr.mxu0 0.0
          %486 = vmatpush2.msra.mxu0 0.0
          %487 = vmatprep.subr.mxu0 0.0
          %488 = vmatpush2.msra.mxu0 0.0
          %489 = vmatprep.subr.mxu0 0.0
          %490 = vmatpush2.msra.mxu0 0.0
          %491 = vmatprep.subr.mxu0 0.0
          %492 = vmatpush2.msra.mxu0 0.0
          %493 = vmatprep.subr.mxu0 0.0
          %494 = vmatpush2.msra.mxu0 0.0
          %495 = vmatprep.subr.mxu0 0.0
          %496 = vmatpush2.msra.mxu0 0.0
          %497 = vmatprep.mubr.f32.mxu0 0.0
          %498 = vmatmul.mubr.f32.gmra.mxu0 %v431
          %v499 = vpop.f32.mrf.mxu0
          %v500 = vadd.f32 0.0, %v499
          %v501 = vpop.f32.mrf.mxu0
          %502 = vdwg.mxu0
          %v503 = vadd.f32 %v428, %v500
          %504 = vst [vmem:[#allocation3] sm:$0xff] %v503
          %v505 = vld [vmem:[#allocation4] sm:$0xff]
          %v506 = vmul.f32 %v427, %v427
          %507 = vmatprep.subr.mxu0 0.0
          %508 = vmatpush1.msra.mxu0 0.0
          %509 = vmatprep.subr.mxu0 0.0
          %510 = vmatpush1.msra.mxu0 0.0
          %511 = vmatprep.subr.mxu0 0.0
          %512 = vmatpush1.msra.mxu0 0.0
          %513 = vmatprep.subr.mxu0 0.0
          %514 = vmatpush1.msra.mxu0 0.0
          %515 = vmatprep.subr.mxu0 0.0
          %516 = vmatpush1.msra.mxu0 0.0
          %517 = vmatprep.subr.mxu0 0.0
          %518 = vmatpush1.msra.mxu0 0.0
          %519 = vmatprep.subr.mxu0 0.0
          %520 = vmatpush1.msra.mxu0 0.0
          %521 = vmatprep.subr.mxu0 0.0
          %522 = vmatpush1.msra.mxu0 0.0
          %523 = vmatprep.subr.mxu0 0.0
          %524 = vmatpush1.msra.mxu0 0.0
          %525 = vmatprep.subr.mxu0 0.0
          %526 = vmatpush1.msra.mxu0 0.0
          %527 = vmatprep.subr.mxu0 0.0
          %528 = vmatpush1.msra.mxu0 0.0
          %529 = vmatprep.subr.mxu0 0.0
          %530 = vmatpush1.msra.mxu0 0.0
          %531 = vmatprep.subr.mxu0 0.0
          %532 = vmatpush1.msra.mxu0 0.0
          %533 = vmatprep.subr.mxu0 0.0
          %534 = vmatpush1.msra.mxu0 0.0
          %535 = vmatprep.subr.mxu0 0.0
          %536 = vmatpush1.msra.mxu0 0.0
          %537 = vmatprep.subr.mxu0 0.0
          %538 = vmatpush1.msra.mxu0 %v506
          %539 = vmatprep.subr.mxu0 0.0
          %540 = vmatpush2.msra.mxu0 0.0
          %541 = vmatprep.subr.mxu0 0.0
          %542 = vmatpush2.msra.mxu0 0.0
          %543 = vmatprep.subr.mxu0 0.0
          %544 = vmatpush2.msra.mxu0 0.0
          %545 = vmatprep.subr.mxu0 0.0
          %546 = vmatpush2.msra.mxu0 0.0
          %547 = vmatprep.subr.mxu0 0.0
          %548 = vmatpush2.msra.mxu0 0.0
          %549 = vmatprep.subr.mxu0 0.0
          %550 = vmatpush2.msra.mxu0 0.0
          %551 = vmatprep.subr.mxu0 0.0
          %552 = vmatpush2.msra.mxu0 0.0
          %553 = vmatprep.subr.mxu0 0.0
          %554 = vmatpush2.msra.mxu0 0.0
          %555 = vmatprep.subr.mxu0 0.0
          %556 = vmatpush2.msra.mxu0 0.0
          %557 = vmatprep.subr.mxu0 0.0
          %558 = vmatpush2.msra.mxu0 0.0
          %559 = vmatprep.subr.mxu0 0.0
          %560 = vmatpush2.msra.mxu0 0.0
          %561 = vmatprep.subr.mxu0 0.0
          %562 = vmatpush2.msra.mxu0 0.0
          %563 = vmatprep.subr.mxu0 0.0
          %564 = vmatpush2.msra.mxu0 0.0
          %565 = vmatprep.subr.mxu0 0.0
          %566 = vmatpush2.msra.mxu0 0.0
          %567 = vmatprep.subr.mxu0 0.0
          %568 = vmatpush2.msra.mxu0 0.0
          %569 = vmatprep.subr.mxu0 0.0
          %570 = vmatpush2.msra.mxu0 0.0
          %571 = vmatprep.mubr.f32.mxu0 0.0
          %572 = vmatmul.mubr.f32.gmra.mxu0 %v431
          %v573 = vpop.f32.mrf.mxu0
          %v574 = vadd.f32 0.0, %v573
          %v575 = vpop.f32.mrf.mxu0
          %576 = vdwg.mxu0
          %v577 = vadd.f32 %v505, %v574
          %578 = vst [vmem:[#allocation4] sm:$0xff] %v577
        $region60: #{tpu_custom_call.1} parent=43 // pred_fallthru
          _
        %p579 = scmp.eq.s32.totalorder %s34, 1
        %p580 = pnand %p579, %p380
        %p581 = pneg %p580
        // Predicated region
        $region61: #{tpu_custom_call.1} parent=43 // pred_check
          _
        $region62: #{tpu_custom_call.1} parent=43 // pred_check_branch
          %583 = sbr.rel (%p580) target = $region64
        $region63: #{tpu_custom_call.1} parent=43 // pred_region
          %v584 = vld [vmem:[%s1] sm:$0x1]
          %v585 = vld [vmem:[#allocation3] sm:$0xff]
          %v586 = vrot.slane %v585, 4
          %v587 = vmax.f32 %v585, %v586
          %v588 = vrot.slane %v587, 2
          %v589 = vmax.f32 %v587, %v588
          %v590 = vrot.slane %v589, 1
          %v591 = vmax.f32 %v589, %v590
          %v592 = vld [vmem:[#allocation4] sm:$0xff]
          %v593 = vrot.slane %v592, 4
          %v594 = vmax.f32 %v592, %v593
          %v595 = vrot.slane %v594, 2
          %v596 = vmax.f32 %v594, %v595
          %v597 = vrot.slane %v596, 1
          %v598 = vmax.f32 %v596, %v597
          %v599 = vld [vmem:[#allocation5] sm:$0xff]
          %v600 = vrot.slane %v599, 4
          %v601 = vmax.f32 %v599, %v600
          %v602 = vrot.slane %v601, 2
          %v603 = vmax.f32 %v601, %v602
          %v604 = vrot.slane %v603, 1
          %v605 = vmax.f32 %v603, %v604
          %v606 = vmul.f32 %v584, 0.0
          %v607 = vadd.f32 %v591, %v606
          %v608 = vmul.f32 %v606, %v584
          %v609 = vsub.f32 %v598, %v608
          %v610 = vlaneseq
          %v611 = vshrl.u32 %v610, 7
          %v612 = vadd.s32 %v611, 8
          %v613 = vadd.s32 %v611, 16
          %v614 = vadd.s32 %v611, 24
          %v615 = vadd.s32 %v611, 32
          %v616 = vadd.s32 %v611, 40
          %v617 = vadd.s32 %v611, 48
          %v618 = vadd.s32 %v611, 56
          %v619 = vadd.s32 %v611, 64
          %v620 = vadd.s32 %v611, 72
          %v621 = vadd.s32 %v611, 80
          %v622 = vadd.s32 %v611, 88
          %v623 = vadd.s32 %v611, 96
          %v624 = vadd.s32 %v611, 104
          %v625 = vadd.s32 %v611, 112
          %v626 = vadd.s32 %v611, 120
          %vm627 = vcmp.lt.s32.totalorder %v611, 0
          %v628 = vsub.s32 0, %v611
          %v629 = vsel %vm627, %v628, %v611
          %v630 = vshrl.u32 %v629, 5
          %v631 = vand.u32 %v629, 31
          %v632 = vsub.s32 0, %v631
          %v633 = vsel %vm627, %v632, %v631
          %vm634 = vcmp.lt.s32.totalorder %v612, 0
          %v635 = vsub.s32 0, %v612
          %v636 = vsel %vm634, %v635, %v612
          %v637 = vshrl.u32 %v636, 5
          %v638 = vand.u32 %v636, 31
          %v639 = vsub.s32 0, %v638
          %v640 = vsel %vm634, %v639, %v638
          %vm641 = vcmp.lt.s32.totalorder %v613, 0
          %v642 = vsub.s32 0, %v613
          %v643 = vsel %vm641, %v642, %v613
          %v644 = vshrl.u32 %v643, 5
          %v645 = vand.u32 %v643, 31
          %v646 = vsub.s32 0, %v645
          %v647 = vsel %vm641, %v646, %v645
          %vm648 = vcmp.lt.s32.totalorder %v614, 0
          %v649 = vsub.s32 0, %v614
          %v650 = vsel %vm648, %v649, %v614
          %v651 = vshrl.u32 %v650, 5
          %v652 = vand.u32 %v650, 31
          %v653 = vsub.s32 0, %v652
          %v654 = vsel %vm648, %v653, %v652
          %vm655 = vcmp.lt.s32.totalorder %v615, 0
          %v656 = vsub.s32 0, %v615
          %v657 = vsel %vm655, %v656, %v615
          %v658 = vshrl.u32 %v657, 5
          %v659 = vand.u32 %v657, 31
          %v660 = vsub.s32 0, %v659
          %v661 = vsel %vm655, %v660, %v659
          %vm662 = vcmp.lt.s32.totalorder %v616, 0
          %v663 = vsub.s32 0, %v616
          %v664 = vsel %vm662, %v663, %v616
          %v665 = vshrl.u32 %v664, 5
          %v666 = vand.u32 %v664, 31
          %v667 = vsub.s32 0, %v666
          %v668 = vsel %vm662, %v667, %v666
          %vm669 = vcmp.lt.s32.totalorder %v617, 0
          %v670 = vsub.s32 0, %v617
          %v671 = vsel %vm669, %v670, %v617
          %v672 = vshrl.u32 %v671, 5
          %v673 = vand.u32 %v671, 31
          %v674 = vsub.s32 0, %v673
          %v675 = vsel %vm669, %v674, %v673
          %vm676 = vcmp.lt.s32.totalorder %v618, 0
          %v677 = vsub.s32 0, %v618
          %v678 = vsel %vm676, %v677, %v618
          %v679 = vshrl.u32 %v678, 5
          %v680 = vand.u32 %v678, 31
          %v681 = vsub.s32 0, %v680
          %v682 = vsel %vm676, %v681, %v680
          %vm683 = vcmp.lt.s32.totalorder %v619, 0
          %v684 = vsub.s32 0, %v619
          %v685 = vsel %vm683, %v684, %v619
          %v686 = vshrl.u32 %v685, 5
          %v687 = vand.u32 %v685, 31
          %v688 = vsub.s32 0, %v687
          %v689 = vsel %vm683, %v688, %v687
          %vm690 = vcmp.lt.s32.totalorder %v620, 0
          %v691 = vsub.s32 0, %v620
          %v692 = vsel %vm690, %v691, %v620
          %v693 = vshrl.u32 %v692, 5
          %v694 = vand.u32 %v692, 31
          %v695 = vsub.s32 0, %v694
          %v696 = vsel %vm690, %v695, %v694
          %vm697 = vcmp.lt.s32.totalorder %v621, 0
          %v698 = vsub.s32 0, %v621
          %v699 = vsel %vm697, %v698, %v621
          %v700 = vshrl.u32 %v699, 5
          %v701 = vand.u32 %v699, 31
          %v702 = vsub.s32 0, %v701
          %v703 = vsel %vm697, %v702, %v701
          %vm704 = vcmp.lt.s32.totalorder %v622, 0
          %v705 = vsub.s32 0, %v622
          %v706 = vsel %vm704, %v705, %v622
          %v707 = vshrl.u32 %v706, 5
          %v708 = vand.u32 %v706, 31
          %v709 = vsub.s32 0, %v708
          %v710 = vsel %vm704, %v709, %v708
          %vm711 = vcmp.lt.s32.totalorder %v623, 0
          %v712 = vsub.s32 0, %v623
          %v713 = vsel %vm711, %v712, %v623
          %v714 = vshrl.u32 %v713, 5
          %v715 = vand.u32 %v713, 31
          %v716 = vsub.s32 0, %v715
          %v717 = vsel %vm711, %v716, %v715
          %vm718 = vcmp.lt.s32.totalorder %v624, 0
          %v719 = vsub.s32 0, %v624
          %v720 = vsel %vm718, %v719, %v624
          %v721 = vshrl.u32 %v720, 5
          %v722 = vand.u32 %v720, 31
          %v723 = vsub.s32 0, %v722
          %v724 = vsel %vm718, %v723, %v722
          %vm725 = vcmp.lt.s32.totalorder %v625, 0
          %v726 = vsub.s32 0, %v625
          %v727 = vsel %vm725, %v726, %v625
          %v728 = vshrl.u32 %v727, 5
          %v729 = vand.u32 %v727, 31
          %v730 = vsub.s32 0, %v729
          %v731 = vsel %vm725, %v730, %v729
          %vm732 = vcmp.lt.s32.totalorder %v626, 0
          %v733 = vsub.s32 0, %v626
          %v734 = vsel %vm732, %v733, %v626
          %v735 = vshrl.u32 %v734, 5
          %v736 = vand.u32 %v734, 31
          %v737 = vsub.s32 0, %v736
          %v738 = vsel %vm732, %v737, %v736
          %vm739 = vcmp.ne.s32.totalorder %v633, 0
          %vm740 = vcmp.ne.s32.totalorder %v640, 0
          %vm741 = vcmp.ne.s32.totalorder %v647, 0
          %vm742 = vcmp.ne.s32.totalorder %v654, 0
          %vm743 = vcmp.ne.s32.totalorder %v661, 0
          %vm744 = vcmp.ne.s32.totalorder %v668, 0
          %vm745 = vcmp.ne.s32.totalorder %v675, 0
          %vm746 = vcmp.ne.s32.totalorder %v682, 0
          %vm747 = vcmp.ne.s32.totalorder %v689, 0
          %vm748 = vcmp.ne.s32.totalorder %v696, 0
          %vm749 = vcmp.ne.s32.totalorder %v703, 0
          %vm750 = vcmp.ne.s32.totalorder %v710, 0
          %vm751 = vcmp.ne.s32.totalorder %v717, 0
          %vm752 = vcmp.ne.s32.totalorder %v724, 0
          %vm753 = vcmp.ne.s32.totalorder %v731, 0
          %vm754 = vcmp.ne.s32.totalorder %v738, 0
          %vm755 = vcmp.lt.s32.totalorder %v633, 0
          %vm756 = vcmp.lt.s32.totalorder %v640, 0
          %vm757 = vcmp.lt.s32.totalorder %v647, 0
          %vm758 = vcmp.lt.s32.totalorder %v654, 0
          %vm759 = vcmp.lt.s32.totalorder %v661, 0
          %vm760 = vcmp.lt.s32.totalorder %v668, 0
          %vm761 = vcmp.lt.s32.totalorder %v675, 0
          %vm762 = vcmp.lt.s32.totalorder %v682, 0
          %vm763 = vcmp.lt.s32.totalorder %v689, 0
          %vm764 = vcmp.lt.s32.totalorder %v696, 0
          %vm765 = vcmp.lt.s32.totalorder %v703, 0
          %vm766 = vcmp.lt.s32.totalorder %v710, 0
          %vm767 = vcmp.lt.s32.totalorder %v717, 0
          %vm768 = vcmp.lt.s32.totalorder %v724, 0
          %vm769 = vcmp.lt.s32.totalorder %v731, 0
          %vm770 = vcmp.lt.s32.totalorder %v738, 0
          %vm771 = vmand %vm755, %vm739
          %vm772 = vmand %vm756, %vm740
          %vm773 = vmand %vm757, %vm741
          %vm774 = vmand %vm758, %vm742
          %vm775 = vmand %vm759, %vm743
          %vm776 = vmand %vm760, %vm744
          %vm777 = vmand %vm761, %vm745
          %vm778 = vmand %vm762, %vm746
          %vm779 = vmand %vm763, %vm747
          %vm780 = vmand %vm764, %vm748
          %vm781 = vmand %vm765, %vm749
          %vm782 = vmand %vm766, %vm750
          %vm783 = vmand %vm767, %vm751
          %vm784 = vmand %vm768, %vm752
          %vm785 = vmand %vm769, %vm753
          %vm786 = vmand %vm770, %vm754
          %v787 = vadd.s32 %v633, 32
          %v788 = vadd.s32 %v640, 32
          %v789 = vadd.s32 %v647, 32
          %v790 = vadd.s32 %v654, 32
          %v791 = vadd.s32 %v661, 32
          %v792 = vadd.s32 %v668, 32
          %v793 = vadd.s32 %v675, 32
          %v794 = vadd.s32 %v682, 32
          %v795 = vadd.s32 %v689, 32
          %v796 = vadd.s32 %v696, 32
          %v797 = vadd.s32 %v703, 32
          %v798 = vadd.s32 %v710, 32
          %v799 = vadd.s32 %v717, 32
          %v800 = vadd.s32 %v724, 32
          %v801 = vadd.s32 %v731, 32
          %v802 = vadd.s32 %v738, 32
          %v803 = vsel %vm771, %v787, %v633
          %v804 = vsel %vm772, %v788, %v640
          %v805 = vsel %vm773, %v789, %v647
          %v806 = vsel %vm774, %v790, %v654
          %v807 = vsel %vm775, %v791, %v661
          %v808 = vsel %vm776, %v792, %v668
          %v809 = vsel %vm777, %v793, %v675
          %v810 = vsel %vm778, %v794, %v682
          %v811 = vsel %vm779, %v795, %v689
          %v812 = vsel %vm780, %v796, %v696
          %v813 = vsel %vm781, %v797, %v703
          %v814 = vsel %vm782, %v798, %v710
          %v815 = vsel %vm783, %v799, %v717
          %v816 = vsel %vm784, %v800, %v724
          %v817 = vsel %vm785, %v801, %v731
          %v818 = vsel %vm786, %v802, %v738
          %v819 = vlaneseq
          %v820 = vand.u32 %v819, 127
          %vm821 = vcmp.eq.s32.totalorder %v803, %v820
          %vm822 = vcmp.eq.s32.totalorder %v804, %v820
          %vm823 = vcmp.eq.s32.totalorder %v805, %v820
          %vm824 = vcmp.eq.s32.totalorder %v806, %v820
          %vm825 = vcmp.eq.s32.totalorder %v807, %v820
          %vm826 = vcmp.eq.s32.totalorder %v808, %v820
          %vm827 = vcmp.eq.s32.totalorder %v809, %v820
          %vm828 = vcmp.eq.s32.totalorder %v810, %v820
          %vm829 = vcmp.eq.s32.totalorder %v811, %v820
          %vm830 = vcmp.eq.s32.totalorder %v812, %v820
          %vm831 = vcmp.eq.s32.totalorder %v813, %v820
          %vm832 = vcmp.eq.s32.totalorder %v814, %v820
          %vm833 = vcmp.eq.s32.totalorder %v815, %v820
          %vm834 = vcmp.eq.s32.totalorder %v816, %v820
          %vm835 = vcmp.eq.s32.totalorder %v817, %v820
          %vm836 = vcmp.eq.s32.totalorder %v818, %v820
          %v837 = vsel %vm821, 1, 0
          %v838 = vsel %vm822, 1, 0
          %v839 = vsel %vm823, 1, 0
          %v840 = vsel %vm824, 1, 0
          %v841 = vsel %vm825, 1, 0
          %v842 = vsel %vm826, 1, 0
          %v843 = vsel %vm827, 1, 0
          %v844 = vsel %vm828, 1, 0
          %v845 = vsel %vm829, 1, 0
          %v846 = vsel %vm830, 1, 0
          %v847 = vsel %vm831, 1, 0
          %v848 = vsel %vm832, 1, 0
          %v849 = vsel %vm833, 1, 0
          %v850 = vsel %vm834, 1, 0
          %v851 = vsel %vm835, 1, 0
          %v852 = vsel %vm836, 1, 0
          %v853 = vcvt.s32.f32 %v837
          %v854 = vcvt.s32.f32 %v838
          %v855 = vcvt.s32.f32 %v839
          %v856 = vcvt.s32.f32 %v840
          %v857 = vcvt.s32.f32 %v841
          %v858 = vcvt.s32.f32 %v842
          %v859 = vcvt.s32.f32 %v843
          %v860 = vcvt.s32.f32 %v844
          %v861 = vcvt.s32.f32 %v845
          %v862 = vcvt.s32.f32 %v846
          %v863 = vcvt.s32.f32 %v847
          %v864 = vcvt.s32.f32 %v848
          %v865 = vcvt.s32.f32 %v849
          %v866 = vcvt.s32.f32 %v850
          %v867 = vcvt.s32.f32 %v851
          %v868 = vcvt.s32.f32 %v852
          %869 = vmatprep.subr.mxu0 0.0
          %870 = vmatpush1.msra.mxu0 %v868
          %871 = vmatprep.subr.mxu0 0.0
          %872 = vmatpush1.msra.mxu0 %v867
          %873 = vmatprep.subr.mxu0 0.0
          %874 = vmatpush1.msra.mxu0 %v866
          %875 = vmatprep.subr.mxu0 0.0
          %876 = vmatpush1.msra.mxu0 %v865
          %877 = vmatprep.subr.mxu0 0.0
          %878 = vmatpush1.msra.mxu0 %v864
          %879 = vmatprep.subr.mxu0 0.0
          %880 = vmatpush1.msra.mxu0 %v863
          %881 = vmatprep.subr.mxu0 0.0
          %882 = vmatpush1.msra.mxu0 %v862
          %883 = vmatprep.subr.mxu0 0.0
          %884 = vmatpush1.msra.mxu0 %v861
          %885 = vmatprep.subr.mxu0 0.0
          %886 = vmatpush1.msra.mxu0 %v860
          %887 = vmatprep.subr.mxu0 0.0
          %888 = vmatpush1.msra.mxu0 %v859
          %889 = vmatprep.subr.mxu0 0.0
          %890 = vmatpush1.msra.mxu0 %v858
          %891 = vmatprep.subr.mxu0 0.0
          %892 = vmatpush1.msra.mxu0 %v857
          %893 = vmatprep.subr.mxu0 0.0
          %894 = vmatpush1.msra.mxu0 %v856
          %895 = vmatprep.subr.mxu0 0.0
          %896 = vmatpush1.msra.mxu0 %v855
          %897 = vmatprep.subr.mxu0 0.0
          %898 = vmatpush1.msra.mxu0 %v854
          %899 = vmatprep.subr.mxu0 0.0
          %900 = vmatpush1.msra.mxu0 %v853
          %901 = vmatprep.subr.mxu0 0.0
          %902 = vmatpush2.msra.mxu0 0.0
          %903 = vmatprep.subr.mxu0 0.0
          %904 = vmatpush2.msra.mxu0 0.0
          %905 = vmatprep.subr.mxu0 0.0
          %906 = vmatpush2.msra.mxu0 0.0
          %907 = vmatprep.subr.mxu0 0.0
          %908 = vmatpush2.msra.mxu0 0.0
          %909 = vmatprep.subr.mxu0 0.0
          %910 = vmatpush2.msra.mxu0 0.0
          %911 = vmatprep.subr.mxu0 0.0
          %912 = vmatpush2.msra.mxu0 0.0
          %913 = vmatprep.subr.mxu0 0.0
          %914 = vmatpush2.msra.mxu0 0.0
          %915 = vmatprep.subr.mxu0 0.0
          %916 = vmatpush2.msra.mxu0 0.0
          %917 = vmatprep.subr.mxu0 0.0
          %918 = vmatpush2.msra.mxu0 0.0
          %919 = vmatprep.subr.mxu0 0.0
          %920 = vmatpush2.msra.mxu0 0.0
          %921 = vmatprep.subr.mxu0 0.0
          %922 = vmatpush2.msra.mxu0 0.0
          %923 = vmatprep.subr.mxu0 0.0
          %924 = vmatpush2.msra.mxu0 0.0
          %925 = vmatprep.subr.mxu0 0.0
          %926 = vmatpush2.msra.mxu0 0.0
          %927 = vmatprep.subr.mxu0 0.0
          %928 = vmatpush2.msra.mxu0 0.0
          %929 = vmatprep.subr.mxu0 0.0
          %930 = vmatpush2.msra.mxu0 0.0
          %931 = vmatprep.subr.mxu0 0.0
          %932 = vmatpush2.msra.mxu0 0.0
          %933 = vmatprep.mubr.f32.mxu0 0.0
          %934 = vmatmul.mubr.f32.gmra.mxu0 %v607
          %v935 = vpop.f32.mrf.mxu0
          %v936 = vadd.f32 0.0, %v935
          %v937 = vpop.f32.mrf.mxu0
          %938 = vdwg.mxu0
          %939 = vmatprep.subr.mxu0 0.0
          %940 = vmatpush1.msra.mxu0 %v868
          %941 = vmatprep.subr.mxu0 0.0
          %942 = vmatpush1.msra.mxu0 %v867
          %943 = vmatprep.subr.mxu0 0.0
          %944 = vmatpush1.msra.mxu0 %v866
          %945 = vmatprep.subr.mxu0 0.0
          %946 = vmatpush1.msra.mxu0 %v865
          %947 = vmatprep.subr.mxu0 0.0
          %948 = vmatpush1.msra.mxu0 %v864
          %949 = vmatprep.subr.mxu0 0.0
          %950 = vmatpush1.msra.mxu0 %v863
          %951 = vmatprep.subr.mxu0 0.0
          %952 = vmatpush1.msra.mxu0 %v862
          %953 = vmatprep.subr.mxu0 0.0
          %954 = vmatpush1.msra.mxu0 %v861
          %955 = vmatprep.subr.mxu0 0.0
          %956 = vmatpush1.msra.mxu0 %v860
          %957 = vmatprep.subr.mxu0 0.0
          %958 = vmatpush1.msra.mxu0 %v859
          %959 = vmatprep.subr.mxu0 0.0
          %960 = vmatpush1.msra.mxu0 %v858
          %961 = vmatprep.subr.mxu0 0.0
          %962 = vmatpush1.msra.mxu0 %v857
          %963 = vmatprep.subr.mxu0 0.0
          %964 = vmatpush1.msra.mxu0 %v856
          %965 = vmatprep.subr.mxu0 0.0
          %966 = vmatpush1.msra.mxu0 %v855
          %967 = vmatprep.subr.mxu0 0.0
          %968 = vmatpush1.msra.mxu0 %v854
          %969 = vmatprep.subr.mxu0 0.0
          %970 = vmatpush1.msra.mxu0 %v853
          %971 = vmatprep.subr.mxu0 0.0
          %972 = vmatpush2.msra.mxu0 0.0
          %973 = vmatprep.subr.mxu0 0.0
          %974 = vmatpush2.msra.mxu0 0.0
          %975 = vmatprep.subr.mxu0 0.0
          %976 = vmatpush2.msra.mxu0 0.0
          %977 = vmatprep.subr.mxu0 0.0
          %978 = vmatpush2.msra.mxu0 0.0
          %979 = vmatprep.subr.mxu0 0.0
          %980 = vmatpush2.msra.mxu0 0.0
          %981 = vmatprep.subr.mxu0 0.0
          %982 = vmatpush2.msra.mxu0 0.0
          %983 = vmatprep.subr.mxu0 0.0
          %984 = vmatpush2.msra.mxu0 0.0
          %985 = vmatprep.subr.mxu0 0.0
          %986 = vmatpush2.msra.mxu0 0.0
          %987 = vmatprep.subr.mxu0 0.0
          %988 = vmatpush2.msra.mxu0 0.0
          %989 = vmatprep.subr.mxu0 0.0
          %990 = vmatpush2.msra.mxu0 0.0
          %991 = vmatprep.subr.mxu0 0.0
          %992 = vmatpush2.msra.mxu0 0.0
          %993 = vmatprep.subr.mxu0 0.0
          %994 = vmatpush2.msra.mxu0 0.0
          %995 = vmatprep.subr.mxu0 0.0
          %996 = vmatpush2.msra.mxu0 0.0
          %997 = vmatprep.subr.mxu0 0.0
          %998 = vmatpush2.msra.mxu0 0.0
          %999 = vmatprep.subr.mxu0 0.0
          %1000 = vmatpush2.msra.mxu0 0.0
          %1001 = vmatprep.subr.mxu0 0.0
          %1002 = vmatpush2.msra.mxu0 0.0
          %1003 = vmatprep.mubr.f32.mxu0 0.0
          %1004 = vmatmul.mubr.f32.gmra.mxu0 %v609
          %v1005 = vpop.f32.mrf.mxu0
          %v1006 = vadd.f32 0.0, %v1005
          %v1007 = vpop.f32.mrf.mxu0
          %1008 = vdwg.mxu0
          %1009 = vmatprep.subr.mxu0 0.0
          %1010 = vmatpush1.msra.mxu0 %v868
          %1011 = vmatprep.subr.mxu0 0.0
          %1012 = vmatpush1.msra.mxu0 %v867
          %1013 = vmatprep.subr.mxu0 0.0
          %1014 = vmatpush1.msra.mxu0 %v866
          %1015 = vmatprep.subr.mxu0 0.0
          %1016 = vmatpush1.msra.mxu0 %v865
          %1017 = vmatprep.subr.mxu0 0.0
          %1018 = vmatpush1.msra.mxu0 %v864
          %1019 = vmatprep.subr.mxu0 0.0
          %1020 = vmatpush1.msra.mxu0 %v863
          %1021 = vmatprep.subr.mxu0 0.0
          %1022 = vmatpush1.msra.mxu0 %v862
          %1023 = vmatprep.subr.mxu0 0.0
          %1024 = vmatpush1.msra.mxu0 %v861
          %1025 = vmatprep.subr.mxu0 0.0
          %1026 = vmatpush1.msra.mxu0 %v860
          %1027 = vmatprep.subr.mxu0 0.0
          %1028 = vmatpush1.msra.mxu0 %v859
          %1029 = vmatprep.subr.mxu0 0.0
          %1030 = vmatpush1.msra.mxu0 %v858
          %1031 = vmatprep.subr.mxu0 0.0
          %1032 = vmatpush1.msra.mxu0 %v857
          %1033 = vmatprep.subr.mxu0 0.0
          %1034 = vmatpush1.msra.mxu0 %v856
          %1035 = vmatprep.subr.mxu0 0.0
          %1036 = vmatpush1.msra.mxu0 %v855
          %1037 = vmatprep.subr.mxu0 0.0
          %1038 = vmatpush1.msra.mxu0 %v854
          %1039 = vmatprep.subr.mxu0 0.0
          %1040 = vmatpush1.msra.mxu0 %v853
          %1041 = vmatprep.subr.mxu0 0.0
          %1042 = vmatpush2.msra.mxu0 0.0
          %1043 = vmatprep.subr.mxu0 0.0
          %1044 = vmatpush2.msra.mxu0 0.0
          %1045 = vmatprep.subr.mxu0 0.0
          %1046 = vmatpush2.msra.mxu0 0.0
          %1047 = vmatprep.subr.mxu0 0.0
          %1048 = vmatpush2.msra.mxu0 0.0
          %1049 = vmatprep.subr.mxu0 0.0
          %1050 = vmatpush2.msra.mxu0 0.0
          %1051 = vmatprep.subr.mxu0 0.0
          %1052 = vmatpush2.msra.mxu0 0.0
          %1053 = vmatprep.subr.mxu0 0.0
          %1054 = vmatpush2.msra.mxu0 0.0
          %1055 = vmatprep.subr.mxu0 0.0
          %1056 = vmatpush2.msra.mxu0 0.0
          %1057 = vmatprep.subr.mxu0 0.0
          %1058 = vmatpush2.msra.mxu0 0.0
          %1059 = vmatprep.subr.mxu0 0.0
          %1060 = vmatpush2.msra.mxu0 0.0
          %1061 = vmatprep.subr.mxu0 0.0
          %1062 = vmatpush2.msra.mxu0 0.0
          %1063 = vmatprep.subr.mxu0 0.0
          %1064 = vmatpush2.msra.mxu0 0.0
          %1065 = vmatprep.subr.mxu0 0.0
          %1066 = vmatpush2.msra.mxu0 0.0
          %1067 = vmatprep.subr.mxu0 0.0
          %1068 = vmatpush2.msra.mxu0 0.0
          %1069 = vmatprep.subr.mxu0 0.0
          %1070 = vmatpush2.msra.mxu0 0.0
          %1071 = vmatprep.subr.mxu0 0.0
          %1072 = vmatpush2.msra.mxu0 0.0
          %1073 = vmatprep.mubr.f32.mxu0 0.0
          %1074 = vmatmul.mubr.f32.gmra.mxu0 %v605
          %v1075 = vpop.f32.mrf.mxu0
          %v1076 = vadd.f32 0.0, %v1075
          %v1077 = vpop.f32.mrf.mxu0
          %1078 = vdwg.mxu0
          %vm1079 = vcmp.gt.f32.partialorder %v1076, 0.5
          %v1080 = vld [vmem:[%s2] sm:$0x1]
          %v1081 = vrcp.pop 32.0
          %v1082 = vmul.f32 %v936, %v1081
          %v1083 = vadd.f32 %v1080, %v1082
          %v1084 = vmul.f32 %v1006, %v1081
          %v1085 = vmul.f32 %v1082, %v1082
          %v1086 = vsub.f32 %v1084, %v1085
          %v1087 = vld [vmem:[%s3] sm:$0x1]
          %v1088 = vld [vmem:[#allocation10] sm:$0x1]
          %v1089 = vld [vmem:[#allocation13] sm:$0x1]
          %s1090 = sld [smem:[#allocation9]]
          %s1091 = scvt.s32.f32 %s1090
          %s1092 = sadd.f32 %s1091, 32.0
          %v1093 = vsub.f32 %v1083, %v1087
          %v1094 = vstv %s1092
          %v1095 = vrcp.pop %v1094
          %s1096 = vtos %v1095
          %s1097 = smul.f32 32.0, %s1096
          %v1098 = vstv %s1097
          %v1099 = vmul.f32 %v1093, %v1098
          %v1100 = vadd.f32 %v1087, %v1099
          %v1101 = vstv %s1091
          %v1102 = vmul.f32 %v1088, %v1101
          %v1103 = vmul.f32 %v1086, 32.0
          %v1104 = vadd.f32 %v1102, %v1103
          %v1105 = vmul.f32 %v1093, %v1093
          %s1106 = smul.f32 %s1091, 32.0
          %v1107 = vstv %s1092
          %v1108 = vrcp.pop %v1107
          %s1109 = vtos %v1108
          %s1110 = smul.f32 %s1106, %s1109
          %v1111 = vstv %s1110
          %v1112 = vmul.f32 %v1105, %v1111
          %v1113 = vadd.f32 %v1104, %v1112
          %v1114 = vstv %s1092
          %v1115 = vrcp.pop %v1114
          %v1116 = vmul.f32 %v1113, %v1115
          %v1117 = vmax.f32 %v1116, 0.01
          %v1118 = vmin.f32 %v1117, 1000.0
          %v1119 = vsel %vm1079, 1, 0
          %v1120 = vcvt.s32.f32 %v1119
          %v1121 = vsub.f32 1.0, %v1120
          %v1122 = vmul.f32 %v1089, %v1121
          %vm1123 = vcmp.gt.f32.partialorder %v1122, 0.5
          %v1124 = vsel %vm1123, %v1087, %v1100
          %v1125 = vsel %vm1123, %v1088, %v1118
          %vm1126 = vcmask 253952
          %1127 = vst.msk [vmem:[#allocation16] sm:$0x1] %vm1126, %v1124
          %1128 = vst.msk [vmem:[#allocation18] sm:$0x1] %vm1126, %v1125
          %1129 = vst.msk [vmem:[#allocation19] sm:$0x1] %vm1126, %v1122
          %v1130 = vadd.f32 %v1125, 1e-08
          %v1131 = vrsqrt.pop %v1130
          %v1132 = vmul.f32 %v1124, %v1131
          %vm1133 = vcmp.lt.s32.totalorder %v820, 0
          %v1134 = vsub.s32 0, %v820
          %v1135 = vsel %vm1133, %v1134, %v820
          %v1136 = vshrl.u32 %v1135, 5
          %v1137 = vand.u32 %v1135, 31
          %v1138 = vsub.s32 0, %v1137
          %v1139 = vsel %vm1133, %v1138, %v1137
          %vm1140 = vcmp.ne.s32.totalorder %v1139, 0
          %vm1141 = vcmp.lt.s32.totalorder %v1139, 0
          %vm1142 = vmand %vm1141, %vm1140
          %v1143 = vadd.s32 %v1139, 32
          %v1144 = vsel %vm1142, %v1143, %v1139
          %vm1145 = vcmp.eq.s32.totalorder %v611, %v1144
          %vm1146 = vcmp.eq.s32.totalorder %v612, %v1144
          %vm1147 = vcmp.eq.s32.totalorder %v613, %v1144
          %vm1148 = vcmp.eq.s32.totalorder %v614, %v1144
          %v1149 = vsel %vm1145, 1, 0
          %v1150 = vsel %vm1146, 1, 0
          %v1151 = vsel %vm1147, 1, 0
          %v1152 = vsel %vm1148, 1, 0
          %v1153 = vcvt.s32.f32 %v1149
          %v1154 = vcvt.s32.f32 %v1150
          %v1155 = vcvt.s32.f32 %v1151
          %v1156 = vcvt.s32.f32 %v1152
          %vm1157 = vcmask 261120
          %v1159 = vsel %vm1157, %v1131, 0
          %1161 = vmatprep.subr.mxu0 0.0
          %1162 = vmatpush1.msra.mxu0 0.0
          %1163 = vmatprep.subr.mxu0 0.0
          %1164 = vmatpush1.msra.mxu0 0.0
          %1165 = vmatprep.subr.mxu0 0.0
          %1166 = vmatpush1.msra.mxu0 0.0
          %1167 = vmatprep.subr.mxu0 0.0
          %1168 = vmatpush1.msra.mxu0 0.0
          %1169 = vmatprep.subr.mxu0 0.0
          %1170 = vmatpush1.msra.mxu0 0.0
          %1171 = vmatprep.subr.mxu0 0.0
          %1172 = vmatpush1.msra.mxu0 0.0
          %1173 = vmatprep.subr.mxu0 0.0
          %1174 = vmatpush1.msra.mxu0 0.0
          %1175 = vmatprep.subr.mxu0 0.0
          %1176 = vmatpush1.msra.mxu0 0.0
          %1177 = vmatprep.subr.mxu0 0.0
          %1178 = vmatpush1.msra.mxu0 0.0
          %1179 = vmatprep.subr.mxu0 0.0
          %1180 = vmatpush1.msra.mxu0 0.0
          %1181 = vmatprep.subr.mxu0 0.0
          %1182 = vmatpush1.msra.mxu0 0.0
          %1183 = vmatprep.subr.mxu0 0.0
          %1184 = vmatpush1.msra.mxu0 0.0
          %1185 = vmatprep.subr.mxu0 0.0
          %1186 = vmatpush1.msra.mxu0 %v1156
          %1187 = vmatprep.subr.mxu0 0.0
          %1188 = vmatpush1.msra.mxu0 %v1155
          %1189 = vmatprep.subr.mxu0 0.0
          %1190 = vmatpush1.msra.mxu0 %v1154
          %1191 = vmatprep.subr.mxu0 0.0
          %1192 = vmatpush1.msra.mxu0 %v1153
          %1193 = vmatprep.subr.mxu0 0.0
          %1194 = vmatpush2.msra.mxu0 0.0
          %1195 = vmatprep.subr.mxu0 0.0
          %1196 = vmatpush2.msra.mxu0 0.0
          %1197 = vmatprep.subr.mxu0 0.0
          %1198 = vmatpush2.msra.mxu0 0.0
          %1199 = vmatprep.subr.mxu0 0.0
          %1200 = vmatpush2.msra.mxu0 0.0
          %1201 = vmatprep.subr.mxu0 0.0
          %1202 = vmatpush2.msra.mxu0 0.0
          %1203 = vmatprep.subr.mxu0 0.0
          %1204 = vmatpush2.msra.mxu0 0.0
          %1205 = vmatprep.subr.mxu0 0.0
          %1206 = vmatpush2.msra.mxu0 0.0
          %1207 = vmatprep.subr.mxu0 0.0
          %1208 = vmatpush2.msra.mxu0 0.0
          %1209 = vmatprep.subr.mxu0 0.0
          %1210 = vmatpush2.msra.mxu0 0.0
          %1211 = vmatprep.subr.mxu0 0.0
          %1212 = vmatpush2.msra.mxu0 0.0
          %1213 = vmatprep.subr.mxu0 0.0
          %1214 = vmatpush2.msra.mxu0 0.0
          %1215 = vmatprep.subr.mxu0 0.0
          %1216 = vmatpush2.msra.mxu0 0.0
          %1217 = vmatprep.subr.mxu0 0.0
          %1218 = vmatpush2.msra.mxu0 0.0
          %1219 = vmatprep.subr.mxu0 0.0
          %1220 = vmatpush2.msra.mxu0 0.0
          %1221 = vmatprep.subr.mxu0 0.0
          %1222 = vmatpush2.msra.mxu0 0.0
          %1223 = vmatprep.subr.mxu0 0.0
          %1224 = vmatpush2.msra.mxu0 0.0
          %1225 = vmatprep.mubr.f32.mxu0 0.0
          %1226 = vmatmul.mubr.f32.gmra.mxu0 %v1159
          %v1227 = vpop.f32.mrf.mxu0
          %v1228 = vadd.f32 0.0, %v1227
          %v1229 = vpop.f32.mrf.mxu0
          %1230 = vdwg.mxu0
          %1231 = vst [vmem:[#allocation6] sm:$0x1] %v1228
          %v1233 = vsel %vm1157, %v1132, 0
          %1235 = vmatprep.subr.mxu0 0.0
          %1236 = vmatpush1.msra.mxu0 0.0
          %1237 = vmatprep.subr.mxu0 0.0
          %1238 = vmatpush1.msra.mxu0 0.0
          %1239 = vmatprep.subr.mxu0 0.0
          %1240 = vmatpush1.msra.mxu0 0.0
          %1241 = vmatprep.subr.mxu0 0.0
          %1242 = vmatpush1.msra.mxu0 0.0
          %1243 = vmatprep.subr.mxu0 0.0
          %1244 = vmatpush1.msra.mxu0 0.0
          %1245 = vmatprep.subr.mxu0 0.0
          %1246 = vmatpush1.msra.mxu0 0.0
          %1247 = vmatprep.subr.mxu0 0.0
          %1248 = vmatpush1.msra.mxu0 0.0
          %1249 = vmatprep.subr.mxu0 0.0
          %1250 = vmatpush1.msra.mxu0 0.0
          %1251 = vmatprep.subr.mxu0 0.0
          %1252 = vmatpush1.msra.mxu0 0.0
          %1253 = vmatprep.subr.mxu0 0.0
          %1254 = vmatpush1.msra.mxu0 0.0
          %1255 = vmatprep.subr.mxu0 0.0
          %1256 = vmatpush1.msra.mxu0 0.0
          %1257 = vmatprep.subr.mxu0 0.0
          %1258 = vmatpush1.msra.mxu0 0.0
          %1259 = vmatprep.subr.mxu0 0.0
          %1260 = vmatpush1.msra.mxu0 %v1156
          %1261 = vmatprep.subr.mxu0 0.0
          %1262 = vmatpush1.msra.mxu0 %v1155
          %1263 = vmatprep.subr.mxu0 0.0
          %1264 = vmatpush1.msra.mxu0 %v1154
          %1265 = vmatprep.subr.mxu0 0.0
          %1266 = vmatpush1.msra.mxu0 %v1153
          %1267 = vmatprep.subr.mxu0 0.0
          %1268 = vmatpush2.msra.mxu0 0.0
          %1269 = vmatprep.subr.mxu0 0.0
          %1270 = vmatpush2.msra.mxu0 0.0
          %1271 = vmatprep.subr.mxu0 0.0
          %1272 = vmatpush2.msra.mxu0 0.0
          %1273 = vmatprep.subr.mxu0 0.0
          %1274 = vmatpush2.msra.mxu0 0.0
          %1275 = vmatprep.subr.mxu0 0.0
          %1276 = vmatpush2.msra.mxu0 0.0
          %1277 = vmatprep.subr.mxu0 0.0
          %1278 = vmatpush2.msra.mxu0 0.0
          %1279 = vmatprep.subr.mxu0 0.0
          %1280 = vmatpush2.msra.mxu0 0.0
          %1281 = vmatprep.subr.mxu0 0.0
          %1282 = vmatpush2.msra.mxu0 0.0
          %1283 = vmatprep.subr.mxu0 0.0
          %1284 = vmatpush2.msra.mxu0 0.0
          %1285 = vmatprep.subr.mxu0 0.0
          %1286 = vmatpush2.msra.mxu0 0.0
          %1287 = vmatprep.subr.mxu0 0.0
          %1288 = vmatpush2.msra.mxu0 0.0
          %1289 = vmatprep.subr.mxu0 0.0
          %1290 = vmatpush2.msra.mxu0 0.0
          %1291 = vmatprep.subr.mxu0 0.0
          %1292 = vmatpush2.msra.mxu0 0.0
          %1293 = vmatprep.subr.mxu0 0.0
          %1294 = vmatpush2.msra.mxu0 0.0
          %1295 = vmatprep.subr.mxu0 0.0
          %1296 = vmatpush2.msra.mxu0 0.0
          %1297 = vmatprep.subr.mxu0 0.0
          %1298 = vmatpush2.msra.mxu0 0.0
          %1299 = vmatprep.mubr.f32.mxu0 0.0
          %1300 = vmatmul.mubr.f32.gmra.mxu0 %v1233
          %v1301 = vpop.f32.mrf.mxu0
          %v1302 = vadd.f32 0.0, %v1301
          %v1303 = vpop.f32.mrf.mxu0
          %1304 = vdwg.mxu0
          %1305 = vst [vmem:[#allocation7] sm:$0x1] %v1302
        $region64: #{tpu_custom_call.1} parent=43 // pred_fallthru
          _
        // Predicated region
        $region65: #{tpu_custom_call.1} parent=43 // pred_check
          %p1306 = pneg %p579
        $region66: #{tpu_custom_call.1} parent=43 // pred_check_branch
          %1308 = sbr.rel (%p1306) target = $region68
        $region67: #{tpu_custom_call.1} parent=43 // pred_region
          %s1309 = smul.u32 %s35, 8
          %s1310 = scalar_lea.vmem [#allocation2], %s1309
          %v1311 = vld [vmem:[%s1310] sm:$0xff]
          %v1312 = vld [vmem:[#allocation6] sm:$0x1]
          %v1314 = vlaneseq
          %v1315 = vshrl.u32 %v1314, 7
          %v1316 = vsub.s32 0, %v1315
          %v1317 = vrot.slane %v1312, %v1316
          %v1319 = vmul.f32 %v1311, %v1317
          %v1320 = vld [vmem:[#allocation7] sm:$0x1]
          %v1322 = vlaneseq
          %v1323 = vshrl.u32 %v1322, 7
          %v1324 = vsub.s32 0, %v1323
          %v1325 = vrot.slane %v1320, %v1324
          %v1327 = vsub.f32 %v1319, %v1325
          %v1328 = vmax.f32 %v1327, -10.0
          %v1329 = vmin.f32 %v1328, 10.0
          %1330 = vst [vmem:[%s363] sm:$0xff] %v1329
        $region68: #{tpu_custom_call.1} parent=43 // pred_fallthru
          _
        %s1331 = sand.u32 %s187, 1
        %s1332 = scalar_lea.sflag [#allocation12], %s1331
        %s1333 = sand.u32 %s187, 1
        %s1334 = smul.addr %s1333, 8
        %s1335 = scalar_lea.vmem [#allocation15], %s1334
        // Predicated region
        $region69: #{tpu_custom_call.1} parent=43 // pred_check
          %p1336 = pneg %p197
        $region70: #{tpu_custom_call.1} parent=43 // pred_check_branch
          %1338 = sbr.rel (%p1336) target = $region72
        $region71: #{tpu_custom_call.1} parent=43 // pred_region
          %s1339 = smul.u32 %s34, %s35
          %s1341 = ssub.s32 128, 128
          %1342 = vsyncadd %s1332, %s1341
          %s1343 = smul.addr %s1339, 128
          %s1344 = scalar_lea.hbm %s7, %s1343
          %s1346 = sshll.u32 %s1335, 4
          %s1347 = int_to_ptr.vmem [resolvable:$true] %s1346
          %1349 = dma.vmem_to_hbm [thread:$0]  %s1347, 128, %s1344, %s1332
        $region72: #{tpu_custom_call.1} parent=43 // pred_fallthru
          _
        // Predicated region
        $region73: #{tpu_custom_call.1} parent=43 // pred_check
          %p1350 = pneg %p218
        $region74: #{tpu_custom_call.1} parent=43 // pred_check_branch
          %1352 = sbr.rel (%p1350) target = $region76
        $region75: #{tpu_custom_call.1} parent=43 // pred_region
          %s1354 = ssub.s32 16, 16
          %1355 = vsyncadd [#allocation17], %s1354
          %s1357 = sshll.u32 [#allocation16], 4
          %s1358 = int_to_ptr.vmem [resolvable:$true] %s1357
          %1360 = dma.vmem_to_hbm [thread:$0]  %s1358, 16, %s8, [#allocation17]
        $region76: #{tpu_custom_call.1} parent=43 // pred_fallthru
          _
        // Predicated region
        $region77: #{tpu_custom_call.1} parent=43 // pred_check
          %p1361 = pneg %p239
        $region78: #{tpu_custom_call.1} parent=43 // pred_check_branch
          %1363 = sbr.rel (%p1361) target = $region80
        $region79: #{tpu_custom_call.1} parent=43 // pred_region
          %s1365 = ssub.s32 16, 16
          %1366 = vsyncadd [#allocation17], %s1365
          %s1368 = sshll.u32 [#allocation18], 4
          %s1369 = int_to_ptr.vmem [resolvable:$true] %s1368
          %1371 = dma.vmem_to_hbm [thread:$0]  %s1369, 16, %s9, [#allocation17]
        $region80: #{tpu_custom_call.1} parent=43 // pred_fallthru
          _
        // Predicated region
        $region81: #{tpu_custom_call.1} parent=43 // pred_check
          %p1372 = pneg %p260
        $region82: #{tpu_custom_call.1} parent=43 // pred_check_branch
          %1374 = sbr.rel (%p1372) target = $region84
        $region83: #{tpu_custom_call.1} parent=43 // pred_region
          %s1376 = ssub.s32 16, 16
          %1377 = vsyncadd [#allocation20], %s1376
          %s1379 = sshll.u32 [#allocation19], 4
          %s1380 = int_to_ptr.vmem [resolvable:$true] %s1379
          %1382 = dma.vmem_to_hbm [thread:$0]  %s1380, 16, %s10, [#allocation20]
        $region84: #{tpu_custom_call.1} parent=43 // pred_fallthru
          _
        // Predicated region
        $region85: #{tpu_custom_call.1} parent=43 // pred_check
          %p1383 = pneg %p218
        $region86: #{tpu_custom_call.1} parent=43 // pred_check_branch
          %1385 = sbr.rel (%p1383) target = $region88
        $region87: #{tpu_custom_call.1} parent=43 // pred_region
          %1386 = dma.done [#allocation17], 16
        $region88: #{tpu_custom_call.1} parent=43 // pred_fallthru
          _
        // Predicated region
        $region89: #{tpu_custom_call.1} parent=43 // pred_check
          %p1387 = pneg %p239
        $region90: #{tpu_custom_call.1} parent=43 // pred_check_branch
          %1389 = sbr.rel (%p1387) target = $region92
        $region91: #{tpu_custom_call.1} parent=43 // pred_region
          %1390 = dma.done [#allocation17], 16
        $region92: #{tpu_custom_call.1} parent=43 // pred_fallthru
          _
        // Predicated region
        $region93: #{tpu_custom_call.1} parent=43 // pred_check
          %p1391 = pneg %p260
        $region94: #{tpu_custom_call.1} parent=43 // pred_check_branch
          %1393 = sbr.rel (%p1391) target = $region96
        $region95: #{tpu_custom_call.1} parent=43 // pred_region
          %1394 = dma.done [#allocation20], 16
        $region96: #{tpu_custom_call.1} parent=43 // pred_fallthru
          _
      $region44: #{tpu_custom_call.1} parent=5 // pred_fallthru
        _
      %p1395 = scmp.le.s32.totalorder 2, %s25
      // Predicated region
      $region97: #{tpu_custom_call.1} parent=5 // pred_check
        %p1396 = pneg %p1395
      $region98: #{tpu_custom_call.1} parent=5 // pred_check_branch
        %1398 = sbr.rel (%p1396) target = $region100
      $region99: #{tpu_custom_call.1} parent=5 // pred_region
        %s1399 = ssub.s32 %s25, 2
        // Predicated region
        $region101: #{tpu_custom_call.1} parent=99 // pred_check
          %p1400 = pneg %p203
        $region102: #{tpu_custom_call.1} parent=99 // pred_check_branch
          %1402 = sbr.rel (%p1400) target = $region104
        $region103: #{tpu_custom_call.1} parent=99 // pred_region
          %s1403 = sand.u32 %s188, 1
          %s1404 = scalar_lea.sflag [#allocation12], %s1403
          %s1405 = sand.u32 %s188, 1
          %s1406 = smul.addr %s1405, 8
          %s1407 = scalar_lea.vmem [#allocation15], %s1406
          %1408 = dma.done %s1404, 128
        $region104: #{tpu_custom_call.1} parent=99 // pred_fallthru
          _
      $region100: #{tpu_custom_call.1} parent=5 // pred_fallthru
        _
    $region6: #{tpu_custom_call.1} parent=1 // loop_footer
      %s29 = sadd.s32 1, %s25
    $region7: #{tpu_custom_call.1} parent=1 // loop_footer_branch
      %24 = sbr.rel target = $region3
    $region8: #{tpu_custom_call.1} parent=1 // loop_exit
      _
    %1409 = vsyncpa [#allocation11], 1
    %s1410 = scalar_lea.sflag [#allocation11], 1
    %1411 = vsyncpa %s1410, 1
    %1412 = vsyncpa [#allocation14], 1
    %1413 = vsyncpa [#allocation12], 1
    %s1414 = scalar_lea.sflag [#allocation12], 1
    %1415 = vsyncpa %s1414, 1
    %1416 = vsyncpa [#allocation17], 1
    %1417 = vsyncpa [#allocation20], 1

</llo_original>
